<compile_context>
chip_gen: v6e
topology: v6e:2x2x1
jax: 0.10.0
libtpu: 0.0.40
codegen_flags: <defaults>
</compile_context>

<pallas_src>
import functools

import jax
import jax.numpy as jnp
import numpy as np
from jax import lax
from jax.experimental import pallas as pl
from jax.experimental.pallas import tpu as pltpu

EPS = 1e-5


# ------------------------------- in-kernel helpers -------------------------------

def _roll_lanes(v, shift):
    """Circular shift along the last (lane) axis of a (B, C, P) array.

    Applied per 2-D (C, P) slab so only the well-trodden 2-D lane-rotate path of the XLU
    is exercised; B is tiny and static, so the Python loop is free.
    """
    parts = [pltpu.roll(v[i], shift=shift, axis=1)[None] for i in range(v.shape[0])]
    if len(parts) == 1:
        return parts[0]
    return jnp.concatenate(parts, axis=0)


def _sum_leading(v):
    """Sum over the leading axis (keepdims) via a static unrolled loop of slab adds."""
    acc = v[0:1]
    for i in range(1, v.shape[0]):
        acc = acc + v[i:i + 1]
    return acc


# ----------------------------------- the kernel -----------------------------------

def _lfem_kernel(x_ref, masks_ref, beca_ref,
                 w1_ref, w2_ref, w3_ref, w4_ref, w5_ref, w6_ref,
                 bn1_ref, bn2_ref, bn3_ref, bn4_ref, bn5_ref, bn6_ref,
                 out_ref, *, width):
    x = x_ref[...]                                  # (N, Cin, P), P = H*W (lane-dense)
    n_img, _, pxl = x.shape
    count = n_img * pxl                             # BatchNorm population size (static)

    masks = masks_ref[...]                          # (4, P) multiplicative boundary masks
    m_hm, m_hp = masks[0:1], masks[1:2]             # "h-1 exists" / "h+1 exists"
    m_wm, m_wp = masks[2:3], masks[3:4]             # "w-1 exists" / "w+1 exists"

    def dw_h(v, taps):                              # depthwise (3,1) conv along H
        vm = _roll_lanes(v, width) * m_hm           # value at h-1
        vp = _roll_lanes(v, pxl - width) * m_hp     # value at h+1
        return taps[0] * vm + taps[1] * v + taps[2] * vp

    def dw_w(v, taps):                              # depthwise (1,3) conv along W
        vm = _roll_lanes(v, 1) * m_wm               # value at w-1
        vp = _roll_lanes(v, pxl - 1) * m_wp         # value at w+1
        return taps[0] * vm + taps[1] * v + taps[2] * vp

    def bnorm(v, gb):                               # training-mode BatchNorm2d, global stats
        mean = _sum_leading(jnp.sum(v, axis=2, keepdims=True)) * (1.0 / count)
        d = v - mean
        var = _sum_leading(jnp.sum(d * d, axis=2, keepdims=True)) * (1.0 / count)
        var = jnp.maximum(var, 0.0)                 # guard fp cancellation
        return gb[0] * (d * lax.rsqrt(var + EPS)) + gb[1]

    def mix(v, wmat):                               # 1x1 conv: out[:,o,:] = sum_c wmat[c,o]*v[:,c,:]
        acc = wmat[0] * v[:, 0:1, :]
        for c in range(1, v.shape[1]):
            acc = acc + wmat[c] * v[:, c:c + 1, :]
        return acc

    # ------------- residual branch: conv1 -> bn1 -> conv2 -> bn2 -------------
    res = bnorm(dw_h(x, w1_ref[...]), bn1_ref[...])
    res = bnorm(dw_w(res, w2_ref[...]), bn2_ref[...])

    # ------------- main branch -------------
    mn = mix(x, w3_ref[...])                                    # conv3 (1x1, Cin -> Cint)
    mn = jnp.maximum(bnorm(mn, bn3_ref[...]), 0.0)              # bn3 + ReLU
    mn = bnorm(dw_h(mn, w4_ref[...]), bn4_ref[...])             # conv4 + bn4
    mn = dw_w(mn, w5_ref[...])                                  # conv5 (bn5 comes after ECA)

    # ECA: global average pool -> 3-tap channel conv (band matrix) -> sigmoid gate
    y = jnp.sum(mn, axis=2, keepdims=True) * (1.0 / pxl)        # (N, Cint, 1)
    beca = beca_ref[...]                                        # (Cint, Cint, 1), columns of band
    yc = beca[0] * y[:, 0:1, :]
    for j in range(1, y.shape[1]):
        yc = yc + beca[j] * y[:, j:j + 1, :]
    gate = 1.0 / (1.0 + jnp.exp(-yc))                           # sigmoid (EUP)
    mn = mn * gate

    mn = bnorm(mn, bn5_ref[...])                                # bn5 (after ECA, as in the module)
    mn = bnorm(mix(mn, w6_ref[...]), bn6_ref[...])              # conv6 (1x1) + bn6

    out_ref[...] = jnp.maximum(mn + res, 0.0)                   # residual add + ReLU


# ------------------------------------ wrapper --------------------------------------

def lfem_forward(x_nchw, p):
    """x_nchw: (N, Cin, H, W) float32 (PyTorch layout). Returns (N, Cout, H, W)."""
    n, cin, h, w = x_nchw.shape
    cint = p["w3"].shape[1]
    cout = p["w6"].shape[1]
    assert cout == cin, "depthwise conv2 requires out_channels == in_channels"
    pxl = h * w
    f32 = jnp.float32

    # NCHW -> (N, C, H*W): contiguous reshape, no transpose / no extra HBM pass.
    x3 = x_nchw.astype(f32).reshape(n, cin, pxl)

    # Static boundary masks for the +/-1 H and W shifts on the flattened pixel axis.
    hh = np.arange(pxl) // w
    ww = np.arange(pxl) % w
    masks = jnp.asarray(
        np.stack([hh > 0, hh < h - 1, ww > 0, ww < w - 1]).astype(np.float32))   # (4, P)

    # ECA 3-tap channel conv as a (Cint, Cint) band matrix, stored transposed so the kernel's
    # broadcast-accumulate reads whole columns.
    we = p["w_eca"].astype(f32)
    band = (we[1] * jnp.eye(cint, dtype=f32)
            + we[0] * jnp.eye(cint, k=-1, dtype=f32)
            + we[2] * jnp.eye(cint, k=1, dtype=f32))
    beca = band.T[:, :, None]                                                    # (Cint, Cint, 1)

    def col(a):   # per-channel params get a unit lane dim so they broadcast along pixels
        return a.astype(f32)[..., None]

    vmem = pl.BlockSpec(memory_space=pltpu.MemorySpace.VMEM)
    operands = (x3, masks, beca,
                col(p["w1"]), col(p["w2"]), col(p["w3"]), col(p["w4"]), col(p["w5"]),
                col(p["w6"]),
                col(p["bn1"]), col(p["bn2"]), col(p["bn3"]), col(p["bn4"]), col(p["bn5"]),
                col(p["bn6"]))

    outf = pl.pallas_call(
        functools.partial(_lfem_kernel, width=w),
        out_shape=jax.ShapeDtypeStruct((n, cout, pxl), f32),
        in_specs=[vmem] * len(operands),
        out_specs=vmem,
        compiler_params=pltpu.CompilerParams(vmem_limit_bytes=32 * 1024 * 1024),
        cost_estimate=pl.CostEstimate(flops=int(60 * n * pxl * (cin + cint)),
                                      transcendentals=int(8 * (cin + cint) + n * cint),
                                      bytes_accessed=int(4 * (2 * n * cin * pxl + 32 * cin))),
    )(*operands)

    return outf.reshape(n, cout, h, w)       # contiguous reshape back to NCHW (free)


# --------------------------- deterministic parameters ---------------------------

def init_params(key, cin, cout, k=3):
    assert cout == cin, "conv2 with groups=in_channels is depthwise only when out==in"
    cint = cin // 4
    ks = jax.random.split(key, 13)
    s = 0.3
    w1 = jax.random.normal(ks[0], (k, cin), jnp.float32) * s      # conv1 taps along H
    w2 = jax.random.normal(ks[1], (k, cout), jnp.float32) * s     # conv2 taps along W
    w3 = jax.random.normal(ks[2], (cin, cint), jnp.float32) * s   # conv3 1x1
    w4 = jax.random.normal(ks[3], (k, cint), jnp.float32) * s     # conv4 taps along H
    w5 = jax.random.normal(ks[4], (k, cint), jnp.float32) * s     # conv5 taps along W
    w_eca = jax.random.normal(ks[5], (k,), jnp.float32) * s       # eca Conv1d(1,1,3) weight
    w6 = jax.random.normal(ks[6], (cint, cout), jnp.float32) * s  # conv6 1x1

    def bn_params(c, kk):   # non-trivial gamma/beta so the BN affine is actually exercised
        kg, kb = jax.random.split(kk)
        return jnp.stack([1.0 + 0.2 * jax.random.normal(kg, (c,), jnp.float32),
                          0.2 * jax.random.normal(kb, (c,), jnp.float32)])

    return dict(w1=w1, w2=w2, w3=w3, w4=w4, w5=w5, w6=w6, w_eca=w_eca,
                bn1=bn_params(cin, ks[7]), bn2=bn_params(cout, ks[8]),
                bn3=bn_params(cint, ks[9]), bn4=bn_params(cint, ks[10]),
                bn5=bn_params(cint, ks[11]), bn6=bn_params(cout, ks[12]))


# ------------------------------- pure-JAX reference -----------------------------

def lfem_ref(x_nchw, p):
    x = jnp.transpose(x_nchw, (0, 2, 3, 1)).astype(jnp.float32)
    cin = x.shape[-1]
    cint = p["w3"].shape[1]
    cout = p["w6"].shape[1]

    def bn(v, gb, eps=EPS):
        mu = jnp.mean(v, axis=(0, 1, 2), keepdims=True)
        var = jnp.mean((v - mu) ** 2, axis=(0, 1, 2), keepdims=True)
        return gb[0] * (v - mu) / jnp.sqrt(var + eps) + gb[1]

    def conv(v, kern, pad, groups=1):
        return lax.conv_general_dilated(
            v, kern, (1, 1), pad,
            dimension_numbers=("NHWC", "HWIO", "NHWC"),
            feature_group_count=groups)

    res = conv(x, p["w1"].reshape(3, 1, 1, cin), ((1, 1), (0, 0)), cin)
    res = bn(res, p["bn1"])
    res = conv(res, p["w2"].reshape(1, 3, 1, cout), ((0, 0), (1, 1)), cin)
    res = bn(res, p["bn2"])

    main = conv(x, p["w3"].reshape(1, 1, cin, cint), ((0, 0), (0, 0)))
    main = jax.nn.relu(bn(main, p["bn3"]))
    main = bn(conv(main, p["w4"].reshape(3, 1, 1, cint), ((1, 1), (0, 0)), cint), p["bn4"])
    main = conv(main, p["w5"].reshape(1, 3, 1, cint), ((0, 0), (1, 1)), cint)

    y = jnp.mean(main, axis=(1, 2))
    yp = jnp.pad(y, ((0, 0), (1, 1)))
    yc = p["w_eca"][0] * yp[:, :-2] + p["w_eca"][1] * yp[:, 1:-1] + p["w_eca"][2] * yp[:, 2:]
    main = main * jax.nn.sigmoid(yc)[:, None, None, :]

    main = bn(main, p["bn5"])
    main = bn(conv(main, p["w6"].reshape(1, 1, cint, cout), ((0, 0), (0, 0))), p["bn6"])
    out = jax.nn.relu(main + res)
    return jnp.transpose(out, (0, 3, 1, 2))


# ------------------------------------ main ---------------------------------------

if __name__ == "__main__":
    key = jax.random.PRNGKey(0)
    kx, kp = jax.random.split(key)

    N, Cin, H, W = 2, 16, 16, 16
    Cout = Cin

    x = jax.random.normal(kx, (N, Cin, H, W), jnp.float32)
    params = init_params(kp, Cin, Cout)

    out = jax.jit(lfem_forward)(x, params)
    out = jax.block_until_ready(out)

    ref = lfem_ref(x, params)
    assert out.shape == (N, Cout, H, W)
    np.testing.assert_allclose(np.asarray(out), np.asarray(ref), rtol=5e-4, atol=5e-4)

    print("KERNEL_OK")
</pallas_src>

<mosaic_0001>
module attributes {stable_mosaic.version = 11 : i64} {
  func.func @_lfem_kernel(%arg0: memref<2x16x256xf32, #tpu.memory_space<vmem>>, %arg1: memref<4x256xf32, #tpu.memory_space<vmem>>, %arg2: memref<4x4x1xf32, #tpu.memory_space<vmem>>, %arg3: memref<3x16x1xf32, #tpu.memory_space<vmem>>, %arg4: memref<3x16x1xf32, #tpu.memory_space<vmem>>, %arg5: memref<16x4x1xf32, #tpu.memory_space<vmem>>, %arg6: memref<3x4x1xf32, #tpu.memory_space<vmem>>, %arg7: memref<3x4x1xf32, #tpu.memory_space<vmem>>, %arg8: memref<4x16x1xf32, #tpu.memory_space<vmem>>, %arg9: memref<2x16x1xf32, #tpu.memory_space<vmem>>, %arg10: memref<2x16x1xf32, #tpu.memory_space<vmem>>, %arg11: memref<2x4x1xf32, #tpu.memory_space<vmem>>, %arg12: memref<2x4x1xf32, #tpu.memory_space<vmem>>, %arg13: memref<2x4x1xf32, #tpu.memory_space<vmem>>, %arg14: memref<2x16x1xf32, #tpu.memory_space<vmem>>, %arg15: memref<2x16x256xf32, #tpu.memory_space<vmem>>) attributes {dimension_semantics = [], scalar_prefetch = 0 : i64, scratch_operands = 0 : i64, tpu.core_type = #tpu.core_type<tc>} {
    %c0 = arith.constant 0 : index
    %c0_0 = arith.constant 0 : index
    %c0_1 = arith.constant 0 : index
    %0 = vector.load %arg0[%c0, %c0_0, %c0_1] : memref<2x16x256xf32, #tpu.memory_space<vmem>>, vector<2x16x256xf32>
    %c0_2 = arith.constant 0 : index
    %c0_3 = arith.constant 0 : index
    %1 = vector.load %arg1[%c0_2, %c0_3] : memref<4x256xf32, #tpu.memory_space<vmem>>, vector<4x256xf32>
    %2 = vector.extract_strided_slice %1 {offsets = [0, 0], sizes = [1, 256], strides = [1, 1]} : vector<4x256xf32> to vector<1x256xf32>
    %3 = vector.extract_strided_slice %1 {offsets = [1, 0], sizes = [1, 256], strides = [1, 1]} : vector<4x256xf32> to vector<1x256xf32>
    %4 = vector.extract_strided_slice %1 {offsets = [2, 0], sizes = [1, 256], strides = [1, 1]} : vector<4x256xf32> to vector<1x256xf32>
    %5 = vector.extract_strided_slice %1 {offsets = [3, 0], sizes = [1, 256], strides = [1, 1]} : vector<4x256xf32> to vector<1x256xf32>
    %c0_4 = arith.constant 0 : index
    %c0_5 = arith.constant 0 : index
    %c0_6 = arith.constant 0 : index
    %6 = vector.load %arg3[%c0_4, %c0_5, %c0_6] : memref<3x16x1xf32, #tpu.memory_space<vmem>>, vector<3x16x1xf32>
    %7 = vector.extract_strided_slice %0 {offsets = [0, 0, 0], sizes = [1, 16, 256], strides = [1, 1, 1]} : vector<2x16x256xf32> to vector<1x16x256xf32>
    %8 = vector.shape_cast %7 : vector<1x16x256xf32> to vector<16x256xf32>
    %c16_i32 = arith.constant 16 : i32
    %9 = tpu.dynamic_rotate %8 by %c16_i32 dim 1 : vector<16x256xf32>, i32 -> vector<16x256xf32>
    %10 = vector.shape_cast %9 : vector<16x256xf32> to vector<1x16x256xf32>
    %11 = vector.extract_strided_slice %0 {offsets = [1, 0, 0], sizes = [1, 16, 256], strides = [1, 1, 1]} : vector<2x16x256xf32> to vector<1x16x256xf32>
    %12 = vector.shape_cast %11 : vector<1x16x256xf32> to vector<16x256xf32>
    %c16_i32_7 = arith.constant 16 : i32
    %13 = tpu.dynamic_rotate %12 by %c16_i32_7 dim 1 : vector<16x256xf32>, i32 -> vector<16x256xf32>
    %14 = vector.shape_cast %13 : vector<16x256xf32> to vector<1x16x256xf32>
    %15 = tpu.concatenate %10, %14 in 0 : vector<1x16x256xf32>, vector<1x16x256xf32> -> vector<2x16x256xf32>
    %16 = vector.shape_cast %2 : vector<1x256xf32> to vector<1x1x256xf32>
    %17 = vector.broadcast %16 : vector<1x1x256xf32> to vector<2x16x256xf32>
    %18 = arith.mulf %15, %17 : vector<2x16x256xf32>
    %19 = vector.extract_strided_slice %0 {offsets = [0, 0, 0], sizes = [1, 16, 256], strides = [1, 1, 1]} : vector<2x16x256xf32> to vector<1x16x256xf32>
    %20 = vector.shape_cast %19 : vector<1x16x256xf32> to vector<16x256xf32>
    %c240_i32 = arith.constant 240 : i32
    %21 = tpu.dynamic_rotate %20 by %c240_i32 dim 1 : vector<16x256xf32>, i32 -> vector<16x256xf32>
    %22 = vector.shape_cast %21 : vector<16x256xf32> to vector<1x16x256xf32>
    %23 = vector.extract_strided_slice %0 {offsets = [1, 0, 0], sizes = [1, 16, 256], strides = [1, 1, 1]} : vector<2x16x256xf32> to vector<1x16x256xf32>
    %24 = vector.shape_cast %23 : vector<1x16x256xf32> to vector<16x256xf32>
    %c240_i32_8 = arith.constant 240 : i32
    %25 = tpu.dynamic_rotate %24 by %c240_i32_8 dim 1 : vector<16x256xf32>, i32 -> vector<16x256xf32>
    %26 = vector.shape_cast %25 : vector<16x256xf32> to vector<1x16x256xf32>
    %27 = tpu.concatenate %22, %26 in 0 : vector<1x16x256xf32>, vector<1x16x256xf32> -> vector<2x16x256xf32>
    %28 = vector.shape_cast %3 : vector<1x256xf32> to vector<1x1x256xf32>
    %29 = vector.broadcast %28 : vector<1x1x256xf32> to vector<2x16x256xf32>
    %30 = arith.mulf %27, %29 : vector<2x16x256xf32>
    %31 = vector.extract_strided_slice %6 {offsets = [0, 0, 0], sizes = [1, 16, 1], strides = [1, 1, 1]} : vector<3x16x1xf32> to vector<1x16x1xf32>
    %32 = vector.shape_cast %31 : vector<1x16x1xf32> to vector<16x1xf32>
    %33 = vector.shape_cast %32 : vector<16x1xf32> to vector<1x16x1xf32>
    %34 = vector.broadcast %33 : vector<1x16x1xf32> to vector<2x16x256xf32>
    %35 = arith.mulf %34, %18 : vector<2x16x256xf32>
    %36 = vector.extract_strided_slice %6 {offsets = [1, 0, 0], sizes = [1, 16, 1], strides = [1, 1, 1]} : vector<3x16x1xf32> to vector<1x16x1xf32>
    %37 = vector.shape_cast %36 : vector<1x16x1xf32> to vector<16x1xf32>
    %38 = vector.shape_cast %37 : vector<16x1xf32> to vector<1x16x1xf32>
    %39 = vector.broadcast %38 : vector<1x16x1xf32> to vector<2x16x256xf32>
    %40 = arith.mulf %39, %0 : vector<2x16x256xf32>
    %41 = arith.addf %35, %40 : vector<2x16x256xf32>
    %42 = vector.extract_strided_slice %6 {offsets = [2, 0, 0], sizes = [1, 16, 1], strides = [1, 1, 1]} : vector<3x16x1xf32> to vector<1x16x1xf32>
    %43 = vector.shape_cast %42 : vector<1x16x1xf32> to vector<16x1xf32>
    %44 = vector.shape_cast %43 : vector<16x1xf32> to vector<1x16x1xf32>
    %45 = vector.broadcast %44 : vector<1x16x1xf32> to vector<2x16x256xf32>
    %46 = arith.mulf %45, %30 : vector<2x16x256xf32>
    %47 = arith.addf %41, %46 : vector<2x16x256xf32>
    %c0_9 = arith.constant 0 : index
    %c0_10 = arith.constant 0 : index
    %c0_11 = arith.constant 0 : index
    %48 = vector.load %arg9[%c0_9, %c0_10, %c0_11] : memref<2x16x1xf32, #tpu.memory_space<vmem>>, vector<2x16x1xf32>
    %cst = arith.constant dense<0.000000e+00> : vector<2x16xf32>
    %49 = vector.multi_reduction <add>, %47, %cst [2] : vector<2x16x256xf32> to vector<2x16xf32>
    %50 = vector.shape_cast %49 : vector<2x16xf32> to vector<2x16x1xf32>
    %51 = vector.extract_strided_slice %50 {offsets = [0, 0, 0], sizes = [1, 16, 1], strides = [1, 1, 1]} : vector<2x16x1xf32> to vector<1x16x1xf32>
    %52 = vector.extract_strided_slice %50 {offsets = [1, 0, 0], sizes = [1, 16, 1], strides = [1, 1, 1]} : vector<2x16x1xf32> to vector<1x16x1xf32>
    %53 = arith.addf %51, %52 : vector<1x16x1xf32>
    %cst_12 = arith.constant 0.001953125 : f32
    %54 = vector.broadcast %cst_12 : f32 to vector<1x16x1xf32>
    %55 = arith.mulf %53, %54 : vector<1x16x1xf32>
    %56 = vector.broadcast %55 : vector<1x16x1xf32> to vector<2x16x256xf32>
    %57 = arith.subf %47, %56 : vector<2x16x256xf32>
    %58 = arith.mulf %57, %57 : vector<2x16x256xf32>
    %cst_13 = arith.constant dense<0.000000e+00> : vector<2x16xf32>
    %59 = vector.multi_reduction <add>, %58, %cst_13 [2] : vector<2x16x256xf32> to vector<2x16xf32>
    %60 = vector.shape_cast %59 : vector<2x16xf32> to vector<2x16x1xf32>
    %61 = vector.extract_strided_slice %60 {offsets = [0, 0, 0], sizes = [1, 16, 1], strides = [1, 1, 1]} : vector<2x16x1xf32> to vector<1x16x1xf32>
    %62 = vector.extract_strided_slice %60 {offsets = [1, 0, 0], sizes = [1, 16, 1], strides = [1, 1, 1]} : vector<2x16x1xf32> to vector<1x16x1xf32>
    %63 = arith.addf %61, %62 : vector<1x16x1xf32>
    %cst_14 = arith.constant 0.001953125 : f32
    %64 = vector.broadcast %cst_14 : f32 to vector<1x16x1xf32>
    %65 = arith.mulf %63, %64 : vector<1x16x1xf32>
    %cst_15 = arith.constant 0.000000e+00 : f32
    %66 = vector.broadcast %cst_15 : f32 to vector<1x16x1xf32>
    %67 = arith.maximumf %65, %66 : vector<1x16x1xf32>
    %68 = vector.extract_strided_slice %48 {offsets = [0, 0, 0], sizes = [1, 16, 1], strides = [1, 1, 1]} : vector<2x16x1xf32> to vector<1x16x1xf32>
    %69 = vector.shape_cast %68 : vector<1x16x1xf32> to vector<16x1xf32>
    %cst_16 = arith.constant 9.99999974E-6 : f32
    %70 = vector.broadcast %cst_16 : f32 to vector<1x16x1xf32>
    %71 = arith.addf %67, %70 : vector<1x16x1xf32>
    %72 = math.rsqrt %71 : vector<1x16x1xf32>
    %73 = vector.broadcast %72 : vector<1x16x1xf32> to vector<2x16x256xf32>
    %74 = arith.mulf %57, %73 : vector<2x16x256xf32>
    %75 = vector.shape_cast %69 : vector<16x1xf32> to vector<1x16x1xf32>
    %76 = vector.broadcast %75 : vector<1x16x1xf32> to vector<2x16x256xf32>
    %77 = arith.mulf %76, %74 : vector<2x16x256xf32>
    %78 = vector.extract_strided_slice %48 {offsets = [1, 0, 0], sizes = [1, 16, 1], strides = [1, 1, 1]} : vector<2x16x1xf32> to vector<1x16x1xf32>
    %79 = vector.shape_cast %78 : vector<1x16x1xf32> to vector<16x1xf32>
    %80 = vector.shape_cast %79 : vector<16x1xf32> to vector<1x16x1xf32>
    %81 = vector.broadcast %80 : vector<1x16x1xf32> to vector<2x16x256xf32>
    %82 = arith.addf %77, %81 : vector<2x16x256xf32>
    %c0_17 = arith.constant 0 : index
    %c0_18 = arith.constant 0 : index
    %c0_19 = arith.constant 0 : index
    %83 = vector.load %arg4[%c0_17, %c0_18, %c0_19] : memref<3x16x1xf32, #tpu.memory_space<vmem>>, vector<3x16x1xf32>
    %84 = vector.extract_strided_slice %82 {offsets = [0, 0, 0], sizes = [1, 16, 256], strides = [1, 1, 1]} : vector<2x16x256xf32> to vector<1x16x256xf32>
    %85 = vector.shape_cast %84 : vector<1x16x256xf32> to vector<16x256xf32>
    %c1_i32 = arith.constant 1 : i32
    %86 = tpu.dynamic_rotate %85 by %c1_i32 dim 1 : vector<16x256xf32>, i32 -> vector<16x256xf32>
    %87 = vector.shape_cast %86 : vector<16x256xf32> to vector<1x16x256xf32>
    %88 = vector.extract_strided_slice %82 {offsets = [1, 0, 0], sizes = [1, 16, 256], strides = [1, 1, 1]} : vector<2x16x256xf32> to vector<1x16x256xf32>
    %89 = vector.shape_cast %88 : vector<1x16x256xf32> to vector<16x256xf32>
    %c1_i32_20 = arith.constant 1 : i32
    %90 = tpu.dynamic_rotate %89 by %c1_i32_20 dim 1 : vector<16x256xf32>, i32 -> vector<16x256xf32>
    %91 = vector.shape_cast %90 : vector<16x256xf32> to vector<1x16x256xf32>
    %92 = tpu.concatenate %87, %91 in 0 : vector<1x16x256xf32>, vector<1x16x256xf32> -> vector<2x16x256xf32>
    %93 = vector.shape_cast %4 : vector<1x256xf32> to vector<1x1x256xf32>
    %94 = vector.broadcast %93 : vector<1x1x256xf32> to vector<2x16x256xf32>
    %95 = arith.mulf %92, %94 : vector<2x16x256xf32>
    %96 = vector.extract_strided_slice %82 {offsets = [0, 0, 0], sizes = [1, 16, 256], strides = [1, 1, 1]} : vector<2x16x256xf32> to vector<1x16x256xf32>
    %97 = vector.shape_cast %96 : vector<1x16x256xf32> to vector<16x256xf32>
    %c255_i32 = arith.constant 255 : i32
    %98 = tpu.dynamic_rotate %97 by %c255_i32 dim 1 : vector<16x256xf32>, i32 -> vector<16x256xf32>
    %99 = vector.shape_cast %98 : vector<16x256xf32> to vector<1x16x256xf32>
    %100 = vector.extract_strided_slice %82 {offsets = [1, 0, 0], sizes = [1, 16, 256], strides = [1, 1, 1]} : vector<2x16x256xf32> to vector<1x16x256xf32>
    %101 = vector.shape_cast %100 : vector<1x16x256xf32> to vector<16x256xf32>
    %c255_i32_21 = arith.constant 255 : i32
    %102 = tpu.dynamic_rotate %101 by %c255_i32_21 dim 1 : vector<16x256xf32>, i32 -> vector<16x256xf32>
    %103 = vector.shape_cast %102 : vector<16x256xf32> to vector<1x16x256xf32>
    %104 = tpu.concatenate %99, %103 in 0 : vector<1x16x256xf32>, vector<1x16x256xf32> -> vector<2x16x256xf32>
    %105 = vector.shape_cast %5 : vector<1x256xf32> to vector<1x1x256xf32>
    %106 = vector.broadcast %105 : vector<1x1x256xf32> to vector<2x16x256xf32>
    %107 = arith.mulf %104, %106 : vector<2x16x256xf32>
    %108 = vector.extract_strided_slice %83 {offsets = [0, 0, 0], sizes = [1, 16, 1], strides = [1, 1, 1]} : vector<3x16x1xf32> to vector<1x16x1xf32>
    %109 = vector.shape_cast %108 : vector<1x16x1xf32> to vector<16x1xf32>
    %110 = vector.shape_cast %109 : vector<16x1xf32> to vector<1x16x1xf32>
    %111 = vector.broadcast %110 : vector<1x16x1xf32> to vector<2x16x256xf32>
    %112 = arith.mulf %111, %95 : vector<2x16x256xf32>
    %113 = vector.extract_strided_slice %83 {offsets = [1, 0, 0], sizes = [1, 16, 1], strides = [1, 1, 1]} : vector<3x16x1xf32> to vector<1x16x1xf32>
    %114 = vector.shape_cast %113 : vector<1x16x1xf32> to vector<16x1xf32>
    %115 = vector.shape_cast %114 : vector<16x1xf32> to vector<1x16x1xf32>
    %116 = vector.broadcast %115 : vector<1x16x1xf32> to vector<2x16x256xf32>
    %117 = arith.mulf %116, %82 : vector<2x16x256xf32>
    %118 = arith.addf %112, %117 : vector<2x16x256xf32>
    %119 = vector.extract_strided_slice %83 {offsets = [2, 0, 0], sizes = [1, 16, 1], strides = [1, 1, 1]} : vector<3x16x1xf32> to vector<1x16x1xf32>
    %120 = vector.shape_cast %119 : vector<1x16x1xf32> to vector<16x1xf32>
    %121 = vector.shape_cast %120 : vector<16x1xf32> to vector<1x16x1xf32>
    %122 = vector.broadcast %121 : vector<1x16x1xf32> to vector<2x16x256xf32>
    %123 = arith.mulf %122, %107 : vector<2x16x256xf32>
    %124 = arith.addf %118, %123 : vector<2x16x256xf32>
    %c0_22 = arith.constant 0 : index
    %c0_23 = arith.constant 0 : index
    %c0_24 = arith.constant 0 : index
    %125 = vector.load %arg10[%c0_22, %c0_23, %c0_24] : memref<2x16x1xf32, #tpu.memory_space<vmem>>, vector<2x16x1xf32>
    %cst_25 = arith.constant dense<0.000000e+00> : vector<2x16xf32>
    %126 = vector.multi_reduction <add>, %124, %cst_25 [2] : vector<2x16x256xf32> to vector<2x16xf32>
    %127 = vector.shape_cast %126 : vector<2x16xf32> to vector<2x16x1xf32>
    %128 = vector.extract_strided_slice %127 {offsets = [0, 0, 0], sizes = [1, 16, 1], strides = [1, 1, 1]} : vector<2x16x1xf32> to vector<1x16x1xf32>
    %129 = vector.extract_strided_slice %127 {offsets = [1, 0, 0], sizes = [1, 16, 1], strides = [1, 1, 1]} : vector<2x16x1xf32> to vector<1x16x1xf32>
    %130 = arith.addf %128, %129 : vector<1x16x1xf32>
    %cst_26 = arith.constant 0.001953125 : f32
    %131 = vector.broadcast %cst_26 : f32 to vector<1x16x1xf32>
    %132 = arith.mulf %130, %131 : vector<1x16x1xf32>
    %133 = vector.broadcast %132 : vector<1x16x1xf32> to vector<2x16x256xf32>
    %134 = arith.subf %124, %133 : vector<2x16x256xf32>
    %135 = arith.mulf %134, %134 : vector<2x16x256xf32>
    %cst_27 = arith.constant dense<0.000000e+00> : vector<2x16xf32>
    %136 = vector.multi_reduction <add>, %135, %cst_27 [2] : vector<2x16x256xf32> to vector<2x16xf32>
    %137 = vector.shape_cast %136 : vector<2x16xf32> to vector<2x16x1xf32>
    %138 = vector.extract_strided_slice %137 {offsets = [0, 0, 0], sizes = [1, 16, 1], strides = [1, 1, 1]} : vector<2x16x1xf32> to vector<1x16x1xf32>
    %139 = vector.extract_strided_slice %137 {offsets = [1, 0, 0], sizes = [1, 16, 1], strides = [1, 1, 1]} : vector<2x16x1xf32> to vector<1x16x1xf32>
    %140 = arith.addf %138, %139 : vector<1x16x1xf32>
    %cst_28 = arith.constant 0.001953125 : f32
    %141 = vector.broadcast %cst_28 : f32 to vector<1x16x1xf32>
    %142 = arith.mulf %140, %141 : vector<1x16x1xf32>
    %cst_29 = arith.constant 0.000000e+00 : f32
    %143 = vector.broadcast %cst_29 : f32 to vector<1x16x1xf32>
    %144 = arith.maximumf %142, %143 : vector<1x16x1xf32>
    %145 = vector.extract_strided_slice %125 {offsets = [0, 0, 0], sizes = [1, 16, 1], strides = [1, 1, 1]} : vector<2x16x1xf32> to vector<1x16x1xf32>
    %146 = vector.shape_cast %145 : vector<1x16x1xf32> to vector<16x1xf32>
    %cst_30 = arith.constant 9.99999974E-6 : f32
    %147 = vector.broadcast %cst_30 : f32 to vector<1x16x1xf32>
    %148 = arith.addf %144, %147 : vector<1x16x1xf32>
    %149 = math.rsqrt %148 : vector<1x16x1xf32>
    %150 = vector.broadcast %149 : vector<1x16x1xf32> to vector<2x16x256xf32>
    %151 = arith.mulf %134, %150 : vector<2x16x256xf32>
    %152 = vector.shape_cast %146 : vector<16x1xf32> to vector<1x16x1xf32>
    %153 = vector.broadcast %152 : vector<1x16x1xf32> to vector<2x16x256xf32>
    %154 = arith.mulf %153, %151 : vector<2x16x256xf32>
    %155 = vector.extract_strided_slice %125 {offsets = [1, 0, 0], sizes = [1, 16, 1], strides = [1, 1, 1]} : vector<2x16x1xf32> to vector<1x16x1xf32>
    %156 = vector.shape_cast %155 : vector<1x16x1xf32> to vector<16x1xf32>
    %157 = vector.shape_cast %156 : vector<16x1xf32> to vector<1x16x1xf32>
    %158 = vector.broadcast %157 : vector<1x16x1xf32> to vector<2x16x256xf32>
    %159 = arith.addf %154, %158 : vector<2x16x256xf32>
    %c0_31 = arith.constant 0 : index
    %c0_32 = arith.constant 0 : index
    %c0_33 = arith.constant 0 : index
    %160 = vector.load %arg5[%c0_31, %c0_32, %c0_33] : memref<16x4x1xf32, #tpu.memory_space<vmem>>, vector<16x4x1xf32>
    %161 = vector.extract_strided_slice %160 {offsets = [0, 0, 0], sizes = [1, 4, 1], strides = [1, 1, 1]} : vector<16x4x1xf32> to vector<1x4x1xf32>
    %162 = vector.shape_cast %161 : vector<1x4x1xf32> to vector<4x1xf32>
    %163 = vector.extract_strided_slice %0 {offsets = [0, 0, 0], sizes = [2, 1, 256], strides = [1, 1, 1]} : vector<2x16x256xf32> to vector<2x1x256xf32>
    %164 = vector.shape_cast %162 : vector<4x1xf32> to vector<1x4x1xf32>
    %165 = vector.broadcast %164 : vector<1x4x1xf32> to vector<2x4x256xf32>
    %166 = vector.broadcast %163 : vector<2x1x256xf32> to vector<2x4x256xf32>
    %167 = arith.mulf %165, %166 : vector<2x4x256xf32>
    %168 = vector.extract_strided_slice %160 {offsets = [1, 0, 0], sizes = [1, 4, 1], strides = [1, 1, 1]} : vector<16x4x1xf32> to vector<1x4x1xf32>
    %169 = vector.shape_cast %168 : vector<1x4x1xf32> to vector<4x1xf32>
    %170 = vector.extract_strided_slice %0 {offsets = [0, 1, 0], sizes = [2, 1, 256], strides = [1, 1, 1]} : vector<2x16x256xf32> to vector<2x1x256xf32>
    %171 = vector.shape_cast %169 : vector<4x1xf32> to vector<1x4x1xf32>
    %172 = vector.broadcast %171 : vector<1x4x1xf32> to vector<2x4x256xf32>
    %173 = vector.broadcast %170 : vector<2x1x256xf32> to vector<2x4x256xf32>
    %174 = arith.mulf %172, %173 : vector<2x4x256xf32>
    %175 = arith.addf %167, %174 : vector<2x4x256xf32>
    %176 = vector.extract_strided_slice %160 {offsets = [2, 0, 0], sizes = [1, 4, 1], strides = [1, 1, 1]} : vector<16x4x1xf32> to vector<1x4x1xf32>
    %177 = vector.shape_cast %176 : vector<1x4x1xf32> to vector<4x1xf32>
    %178 = vector.extract_strided_slice %0 {offsets = [0, 2, 0], sizes = [2, 1, 256], strides = [1, 1, 1]} : vector<2x16x256xf32> to vector<2x1x256xf32>
    %179 = vector.shape_cast %177 : vector<4x1xf32> to vector<1x4x1xf32>
    %180 = vector.broadcast %179 : vector<1x4x1xf32> to vector<2x4x256xf32>
    %181 = vector.broadcast %178 : vector<2x1x256xf32> to vector<2x4x256xf32>
    %182 = arith.mulf %180, %181 : vector<2x4x256xf32>
    %183 = arith.addf %175, %182 : vector<2x4x256xf32>
    %184 = vector.extract_strided_slice %160 {offsets = [3, 0, 0], sizes = [1, 4, 1], strides = [1, 1, 1]} : vector<16x4x1xf32> to vector<1x4x1xf32>
    %185 = vector.shape_cast %184 : vector<1x4x1xf32> to vector<4x1xf32>
    %186 = vector.extract_strided_slice %0 {offsets = [0, 3, 0], sizes = [2, 1, 256], strides = [1, 1, 1]} : vector<2x16x256xf32> to vector<2x1x256xf32>
    %187 = vector.shape_cast %185 : vector<4x1xf32> to vector<1x4x1xf32>
    %188 = vector.broadcast %187 : vector<1x4x1xf32> to vector<2x4x256xf32>
    %189 = vector.broadcast %186 : vector<2x1x256xf32> to vector<2x4x256xf32>
    %190 = arith.mulf %188, %189 : vector<2x4x256xf32>
    %191 = arith.addf %183, %190 : vector<2x4x256xf32>
    %192 = vector.extract_strided_slice %160 {offsets = [4, 0, 0], sizes = [1, 4, 1], strides = [1, 1, 1]} : vector<16x4x1xf32> to vector<1x4x1xf32>
    %193 = vector.shape_cast %192 : vector<1x4x1xf32> to vector<4x1xf32>
    %194 = vector.extract_strided_slice %0 {offsets = [0, 4, 0], sizes = [2, 1, 256], strides = [1, 1, 1]} : vector<2x16x256xf32> to vector<2x1x256xf32>
    %195 = vector.shape_cast %193 : vector<4x1xf32> to vector<1x4x1xf32>
    %196 = vector.broadcast %195 : vector<1x4x1xf32> to vector<2x4x256xf32>
    %197 = vector.broadcast %194 : vector<2x1x256xf32> to vector<2x4x256xf32>
    %198 = arith.mulf %196, %197 : vector<2x4x256xf32>
    %199 = arith.addf %191, %198 : vector<2x4x256xf32>
    %200 = vector.extract_strided_slice %160 {offsets = [5, 0, 0], sizes = [1, 4, 1], strides = [1, 1, 1]} : vector<16x4x1xf32> to vector<1x4x1xf32>
    %201 = vector.shape_cast %200 : vector<1x4x1xf32> to vector<4x1xf32>
    %202 = vector.extract_strided_slice %0 {offsets = [0, 5, 0], sizes = [2, 1, 256], strides = [1, 1, 1]} : vector<2x16x256xf32> to vector<2x1x256xf32>
    %203 = vector.shape_cast %201 : vector<4x1xf32> to vector<1x4x1xf32>
    %204 = vector.broadcast %203 : vector<1x4x1xf32> to vector<2x4x256xf32>
    %205 = vector.broadcast %202 : vector<2x1x256xf32> to vector<2x4x256xf32>
    %206 = arith.mulf %204, %205 : vector<2x4x256xf32>
    %207 = arith.addf %199, %206 : vector<2x4x256xf32>
    %208 = vector.extract_strided_slice %160 {offsets = [6, 0, 0], sizes = [1, 4, 1], strides = [1, 1, 1]} : vector<16x4x1xf32> to vector<1x4x1xf32>
    %209 = vector.shape_cast %208 : vector<1x4x1xf32> to vector<4x1xf32>
    %210 = vector.extract_strided_slice %0 {offsets = [0, 6, 0], sizes = [2, 1, 256], strides = [1, 1, 1]} : vector<2x16x256xf32> to vector<2x1x256xf32>
    %211 = vector.shape_cast %209 : vector<4x1xf32> to vector<1x4x1xf32>
    %212 = vector.broadcast %211 : vector<1x4x1xf32> to vector<2x4x256xf32>
    %213 = vector.broadcast %210 : vector<2x1x256xf32> to vector<2x4x256xf32>
    %214 = arith.mulf %212, %213 : vector<2x4x256xf32>
    %215 = arith.addf %207, %214 : vector<2x4x256xf32>
    %216 = vector.extract_strided_slice %160 {offsets = [7, 0, 0], sizes = [1, 4, 1], strides = [1, 1, 1]} : vector<16x4x1xf32> to vector<1x4x1xf32>
    %217 = vector.shape_cast %216 : vector<1x4x1xf32> to vector<4x1xf32>
    %218 = vector.extract_strided_slice %0 {offsets = [0, 7, 0], sizes = [2, 1, 256], strides = [1, 1, 1]} : vector<2x16x256xf32> to vector<2x1x256xf32>
    %219 = vector.shape_cast %217 : vector<4x1xf32> to vector<1x4x1xf32>
    %220 = vector.broadcast %219 : vector<1x4x1xf32> to vector<2x4x256xf32>
    %221 = vector.broadcast %218 : vector<2x1x256xf32> to vector<2x4x256xf32>
    %222 = arith.mulf %220, %221 : vector<2x4x256xf32>
    %223 = arith.addf %215, %222 : vector<2x4x256xf32>
    %224 = vector.extract_strided_slice %160 {offsets = [8, 0, 0], sizes = [1, 4, 1], strides = [1, 1, 1]} : vector<16x4x1xf32> to vector<1x4x1xf32>
    %225 = vector.shape_cast %224 : vector<1x4x1xf32> to vector<4x1xf32>
    %226 = vector.extract_strided_slice %0 {offsets = [0, 8, 0], sizes = [2, 1, 256], strides = [1, 1, 1]} : vector<2x16x256xf32> to vector<2x1x256xf32>
    %227 = vector.shape_cast %225 : vector<4x1xf32> to vector<1x4x1xf32>
    %228 = vector.broadcast %227 : vector<1x4x1xf32> to vector<2x4x256xf32>
    %229 = vector.broadcast %226 : vector<2x1x256xf32> to vector<2x4x256xf32>
    %230 = arith.mulf %228, %229 : vector<2x4x256xf32>
    %231 = arith.addf %223, %230 : vector<2x4x256xf32>
    %232 = vector.extract_strided_slice %160 {offsets = [9, 0, 0], sizes = [1, 4, 1], strides = [1, 1, 1]} : vector<16x4x1xf32> to vector<1x4x1xf32>
    %233 = vector.shape_cast %232 : vector<1x4x1xf32> to vector<4x1xf32>
    %234 = vector.extract_strided_slice %0 {offsets = [0, 9, 0], sizes = [2, 1, 256], strides = [1, 1, 1]} : vector<2x16x256xf32> to vector<2x1x256xf32>
    %235 = vector.shape_cast %233 : vector<4x1xf32> to vector<1x4x1xf32>
    %236 = vector.broadcast %235 : vector<1x4x1xf32> to vector<2x4x256xf32>
    %237 = vector.broadcast %234 : vector<2x1x256xf32> to vector<2x4x256xf32>
    %238 = arith.mulf %236, %237 : vector<2x4x256xf32>
    %239 = arith.addf %231, %238 : vector<2x4x256xf32>
    %240 = vector.extract_strided_slice %160 {offsets = [10, 0, 0], sizes = [1, 4, 1], strides = [1, 1, 1]} : vector<16x4x1xf32> to vector<1x4x1xf32>
    %241 = vector.shape_cast %240 : vector<1x4x1xf32> to vector<4x1xf32>
    %242 = vector.extract_strided_slice %0 {offsets = [0, 10, 0], sizes = [2, 1, 256], strides = [1, 1, 1]} : vector<2x16x256xf32> to vector<2x1x256xf32>
    %243 = vector.shape_cast %241 : vector<4x1xf32> to vector<1x4x1xf32>
    %244 = vector.broadcast %243 : vector<1x4x1xf32> to vector<2x4x256xf32>
    %245 = vector.broadcast %242 : vector<2x1x256xf32> to vector<2x4x256xf32>
    %246 = arith.mulf %244, %245 : vector<2x4x256xf32>
    %247 = arith.addf %239, %246 : vector<2x4x256xf32>
    %248 = vector.extract_strided_slice %160 {offsets = [11, 0, 0], sizes = [1, 4, 1], strides = [1, 1, 1]} : vector<16x4x1xf32> to vector<1x4x1xf32>
    %249 = vector.shape_cast %248 : vector<1x4x1xf32> to vector<4x1xf32>
    %250 = vector.extract_strided_slice %0 {offsets = [0, 11, 0], sizes = [2, 1, 256], strides = [1, 1, 1]} : vector<2x16x256xf32> to vector<2x1x256xf32>
    %251 = vector.shape_cast %249 : vector<4x1xf32> to vector<1x4x1xf32>
    %252 = vector.broadcast %251 : vector<1x4x1xf32> to vector<2x4x256xf32>
    %253 = vector.broadcast %250 : vector<2x1x256xf32> to vector<2x4x256xf32>
    %254 = arith.mulf %252, %253 : vector<2x4x256xf32>
    %255 = arith.addf %247, %254 : vector<2x4x256xf32>
    %256 = vector.extract_strided_slice %160 {offsets = [12, 0, 0], sizes = [1, 4, 1], strides = [1, 1, 1]} : vector<16x4x1xf32> to vector<1x4x1xf32>
    %257 = vector.shape_cast %256 : vector<1x4x1xf32> to vector<4x1xf32>
    %258 = vector.extract_strided_slice %0 {offsets = [0, 12, 0], sizes = [2, 1, 256], strides = [1, 1, 1]} : vector<2x16x256xf32> to vector<2x1x256xf32>
    %259 = vector.shape_cast %257 : vector<4x1xf32> to vector<1x4x1xf32>
    %260 = vector.broadcast %259 : vector<1x4x1xf32> to vector<2x4x256xf32>
    %261 = vector.broadcast %258 : vector<2x1x256xf32> to vector<2x4x256xf32>
    %262 = arith.mulf %260, %261 : vector<2x4x256xf32>
    %263 = arith.addf %255, %262 : vector<2x4x256xf32>
    %264 = vector.extract_strided_slice %160 {offsets = [13, 0, 0], sizes = [1, 4, 1], strides = [1, 1, 1]} : vector<16x4x1xf32> to vector<1x4x1xf32>
    %265 = vector.shape_cast %264 : vector<1x4x1xf32> to vector<4x1xf32>
    %266 = vector.extract_strided_slice %0 {offsets = [0, 13, 0], sizes = [2, 1, 256], strides = [1, 1, 1]} : vector<2x16x256xf32> to vector<2x1x256xf32>
    %267 = vector.shape_cast %265 : vector<4x1xf32> to vector<1x4x1xf32>
    %268 = vector.broadcast %267 : vector<1x4x1xf32> to vector<2x4x256xf32>
    %269 = vector.broadcast %266 : vector<2x1x256xf32> to vector<2x4x256xf32>
    %270 = arith.mulf %268, %269 : vector<2x4x256xf32>
    %271 = arith.addf %263, %270 : vector<2x4x256xf32>
    %272 = vector.extract_strided_slice %160 {offsets = [14, 0, 0], sizes = [1, 4, 1], strides = [1, 1, 1]} : vector<16x4x1xf32> to vector<1x4x1xf32>
    %273 = vector.shape_cast %272 : vector<1x4x1xf32> to vector<4x1xf32>
    %274 = vector.extract_strided_slice %0 {offsets = [0, 14, 0], sizes = [2, 1, 256], strides = [1, 1, 1]} : vector<2x16x256xf32> to vector<2x1x256xf32>
    %275 = vector.shape_cast %273 : vector<4x1xf32> to vector<1x4x1xf32>
    %276 = vector.broadcast %275 : vector<1x4x1xf32> to vector<2x4x256xf32>
    %277 = vector.broadcast %274 : vector<2x1x256xf32> to vector<2x4x256xf32>
    %278 = arith.mulf %276, %277 : vector<2x4x256xf32>
    %279 = arith.addf %271, %278 : vector<2x4x256xf32>
    %280 = vector.extract_strided_slice %160 {offsets = [15, 0, 0], sizes = [1, 4, 1], strides = [1, 1, 1]} : vector<16x4x1xf32> to vector<1x4x1xf32>
    %281 = vector.shape_cast %280 : vector<1x4x1xf32> to vector<4x1xf32>
    %282 = vector.extract_strided_slice %0 {offsets = [0, 15, 0], sizes = [2, 1, 256], strides = [1, 1, 1]} : vector<2x16x256xf32> to vector<2x1x256xf32>
    %283 = vector.shape_cast %281 : vector<4x1xf32> to vector<1x4x1xf32>
    %284 = vector.broadcast %283 : vector<1x4x1xf32> to vector<2x4x256xf32>
    %285 = vector.broadcast %282 : vector<2x1x256xf32> to vector<2x4x256xf32>
    %286 = arith.mulf %284, %285 : vector<2x4x256xf32>
    %287 = arith.addf %279, %286 : vector<2x4x256xf32>
    %c0_34 = arith.constant 0 : index
    %c0_35 = arith.constant 0 : index
    %c0_36 = arith.constant 0 : index
    %288 = vector.load %arg11[%c0_34, %c0_35, %c0_36] : memref<2x4x1xf32, #tpu.memory_space<vmem>>, vector<2x4x1xf32>
    %cst_37 = arith.constant dense<0.000000e+00> : vector<2x4xf32>
    %289 = vector.multi_reduction <add>, %287, %cst_37 [2] : vector<2x4x256xf32> to vector<2x4xf32>
    %290 = vector.shape_cast %289 : vector<2x4xf32> to vector<2x4x1xf32>
    %291 = vector.extract_strided_slice %290 {offsets = [0, 0, 0], sizes = [1, 4, 1], strides = [1, 1, 1]} : vector<2x4x1xf32> to vector<1x4x1xf32>
    %292 = vector.extract_strided_slice %290 {offsets = [1, 0, 0], sizes = [1, 4, 1], strides = [1, 1, 1]} : vector<2x4x1xf32> to vector<1x4x1xf32>
    %293 = arith.addf %291, %292 : vector<1x4x1xf32>
    %cst_38 = arith.constant 0.001953125 : f32
    %294 = vector.broadcast %cst_38 : f32 to vector<1x4x1xf32>
    %295 = arith.mulf %293, %294 : vector<1x4x1xf32>
    %296 = vector.broadcast %295 : vector<1x4x1xf32> to vector<2x4x256xf32>
    %297 = arith.subf %287, %296 : vector<2x4x256xf32>
    %298 = arith.mulf %297, %297 : vector<2x4x256xf32>
    %cst_39 = arith.constant dense<0.000000e+00> : vector<2x4xf32>
    %299 = vector.multi_reduction <add>, %298, %cst_39 [2] : vector<2x4x256xf32> to vector<2x4xf32>
    %300 = vector.shape_cast %299 : vector<2x4xf32> to vector<2x4x1xf32>
    %301 = vector.extract_strided_slice %300 {offsets = [0, 0, 0], sizes = [1, 4, 1], strides = [1, 1, 1]} : vector<2x4x1xf32> to vector<1x4x1xf32>
    %302 = vector.extract_strided_slice %300 {offsets = [1, 0, 0], sizes = [1, 4, 1], strides = [1, 1, 1]} : vector<2x4x1xf32> to vector<1x4x1xf32>
    %303 = arith.addf %301, %302 : vector<1x4x1xf32>
    %cst_40 = arith.constant 0.001953125 : f32
    %304 = vector.broadcast %cst_40 : f32 to vector<1x4x1xf32>
    %305 = arith.mulf %303, %304 : vector<1x4x1xf32>
    %cst_41 = arith.constant 0.000000e+00 : f32
    %306 = vector.broadcast %cst_41 : f32 to vector<1x4x1xf32>
    %307 = arith.maximumf %305, %306 : vector<1x4x1xf32>
    %308 = vector.extract_strided_slice %288 {offsets = [0, 0, 0], sizes = [1, 4, 1], strides = [1, 1, 1]} : vector<2x4x1xf32> to vector<1x4x1xf32>
    %309 = vector.shape_cast %308 : vector<1x4x1xf32> to vector<4x1xf32>
    %cst_42 = arith.constant 9.99999974E-6 : f32
    %310 = vector.broadcast %cst_42 : f32 to vector<1x4x1xf32>
    %311 = arith.addf %307, %310 : vector<1x4x1xf32>
    %312 = math.rsqrt %311 : vector<1x4x1xf32>
    %313 = vector.broadcast %312 : vector<1x4x1xf32> to vector<2x4x256xf32>
    %314 = arith.mulf %297, %313 : vector<2x4x256xf32>
    %315 = vector.shape_cast %309 : vector<4x1xf32> to vector<1x4x1xf32>
    %316 = vector.broadcast %315 : vector<1x4x1xf32> to vector<2x4x256xf32>
    %317 = arith.mulf %316, %314 : vector<2x4x256xf32>
    %318 = vector.extract_strided_slice %288 {offsets = [1, 0, 0], sizes = [1, 4, 1], strides = [1, 1, 1]} : vector<2x4x1xf32> to vector<1x4x1xf32>
    %319 = vector.shape_cast %318 : vector<1x4x1xf32> to vector<4x1xf32>
    %320 = vector.shape_cast %319 : vector<4x1xf32> to vector<1x4x1xf32>
    %321 = vector.broadcast %320 : vector<1x4x1xf32> to vector<2x4x256xf32>
    %322 = arith.addf %317, %321 : vector<2x4x256xf32>
    %cst_43 = arith.constant 0.000000e+00 : f32
    %323 = vector.broadcast %cst_43 : f32 to vector<2x4x256xf32>
    %324 = arith.maximumf %322, %323 : vector<2x4x256xf32>
    %c0_44 = arith.constant 0 : index
    %c0_45 = arith.constant 0 : index
    %c0_46 = arith.constant 0 : index
    %325 = vector.load %arg6[%c0_44, %c0_45, %c0_46] : memref<3x4x1xf32, #tpu.memory_space<vmem>>, vector<3x4x1xf32>
    %326 = vector.extract_strided_slice %324 {offsets = [0, 0, 0], sizes = [1, 4, 256], strides = [1, 1, 1]} : vector<2x4x256xf32> to vector<1x4x256xf32>
    %327 = vector.shape_cast %326 : vector<1x4x256xf32> to vector<4x256xf32>
    %c16_i32_47 = arith.constant 16 : i32
    %328 = tpu.dynamic_rotate %327 by %c16_i32_47 dim 1 : vector<4x256xf32>, i32 -> vector<4x256xf32>
    %329 = vector.shape_cast %328 : vector<4x256xf32> to vector<1x4x256xf32>
    %330 = vector.extract_strided_slice %324 {offsets = [1, 0, 0], sizes = [1, 4, 256], strides = [1, 1, 1]} : vector<2x4x256xf32> to vector<1x4x256xf32>
    %331 = vector.shape_cast %330 : vector<1x4x256xf32> to vector<4x256xf32>
    %c16_i32_48 = arith.constant 16 : i32
    %332 = tpu.dynamic_rotate %331 by %c16_i32_48 dim 1 : vector<4x256xf32>, i32 -> vector<4x256xf32>
    %333 = vector.shape_cast %332 : vector<4x256xf32> to vector<1x4x256xf32>
    %334 = tpu.concatenate %329, %333 in 0 : vector<1x4x256xf32>, vector<1x4x256xf32> -> vector<2x4x256xf32>
    %335 = vector.shape_cast %2 : vector<1x256xf32> to vector<1x1x256xf32>
    %336 = vector.broadcast %335 : vector<1x1x256xf32> to vector<2x4x256xf32>
    %337 = arith.mulf %334, %336 : vector<2x4x256xf32>
    %338 = vector.extract_strided_slice %324 {offsets = [0, 0, 0], sizes = [1, 4, 256], strides = [1, 1, 1]} : vector<2x4x256xf32> to vector<1x4x256xf32>
    %339 = vector.shape_cast %338 : vector<1x4x256xf32> to vector<4x256xf32>
    %c240_i32_49 = arith.constant 240 : i32
    %340 = tpu.dynamic_rotate %339 by %c240_i32_49 dim 1 : vector<4x256xf32>, i32 -> vector<4x256xf32>
    %341 = vector.shape_cast %340 : vector<4x256xf32> to vector<1x4x256xf32>
    %342 = vector.extract_strided_slice %324 {offsets = [1, 0, 0], sizes = [1, 4, 256], strides = [1, 1, 1]} : vector<2x4x256xf32> to vector<1x4x256xf32>
    %343 = vector.shape_cast %342 : vector<1x4x256xf32> to vector<4x256xf32>
    %c240_i32_50 = arith.constant 240 : i32
    %344 = tpu.dynamic_rotate %343 by %c240_i32_50 dim 1 : vector<4x256xf32>, i32 -> vector<4x256xf32>
    %345 = vector.shape_cast %344 : vector<4x256xf32> to vector<1x4x256xf32>
    %346 = tpu.concatenate %341, %345 in 0 : vector<1x4x256xf32>, vector<1x4x256xf32> -> vector<2x4x256xf32>
    %347 = vector.shape_cast %3 : vector<1x256xf32> to vector<1x1x256xf32>
    %348 = vector.broadcast %347 : vector<1x1x256xf32> to vector<2x4x256xf32>
    %349 = arith.mulf %346, %348 : vector<2x4x256xf32>
    %350 = vector.extract_strided_slice %325 {offsets = [0, 0, 0], sizes = [1, 4, 1], strides = [1, 1, 1]} : vector<3x4x1xf32> to vector<1x4x1xf32>
    %351 = vector.shape_cast %350 : vector<1x4x1xf32> to vector<4x1xf32>
    %352 = vector.shape_cast %351 : vector<4x1xf32> to vector<1x4x1xf32>
    %353 = vector.broadcast %352 : vector<1x4x1xf32> to vector<2x4x256xf32>
    %354 = arith.mulf %353, %337 : vector<2x4x256xf32>
    %355 = vector.extract_strided_slice %325 {offsets = [1, 0, 0], sizes = [1, 4, 1], strides = [1, 1, 1]} : vector<3x4x1xf32> to vector<1x4x1xf32>
    %356 = vector.shape_cast %355 : vector<1x4x1xf32> to vector<4x1xf32>
    %357 = vector.shape_cast %356 : vector<4x1xf32> to vector<1x4x1xf32>
    %358 = vector.broadcast %357 : vector<1x4x1xf32> to vector<2x4x256xf32>
    %359 = arith.mulf %358, %324 : vector<2x4x256xf32>
    %360 = arith.addf %354, %359 : vector<2x4x256xf32>
    %361 = vector.extract_strided_slice %325 {offsets = [2, 0, 0], sizes = [1, 4, 1], strides = [1, 1, 1]} : vector<3x4x1xf32> to vector<1x4x1xf32>
    %362 = vector.shape_cast %361 : vector<1x4x1xf32> to vector<4x1xf32>
    %363 = vector.shape_cast %362 : vector<4x1xf32> to vector<1x4x1xf32>
    %364 = vector.broadcast %363 : vector<1x4x1xf32> to vector<2x4x256xf32>
    %365 = arith.mulf %364, %349 : vector<2x4x256xf32>
    %366 = arith.addf %360, %365 : vector<2x4x256xf32>
    %c0_51 = arith.constant 0 : index
    %c0_52 = arith.constant 0 : index
    %c0_53 = arith.constant 0 : index
    %367 = vector.load %arg12[%c0_51, %c0_52, %c0_53] : memref<2x4x1xf32, #tpu.memory_space<vmem>>, vector<2x4x1xf32>
    %cst_54 = arith.constant dense<0.000000e+00> : vector<2x4xf32>
    %368 = vector.multi_reduction <add>, %366, %cst_54 [2] : vector<2x4x256xf32> to vector<2x4xf32>
    %369 = vector.shape_cast %368 : vector<2x4xf32> to vector<2x4x1xf32>
    %370 = vector.extract_strided_slice %369 {offsets = [0, 0, 0], sizes = [1, 4, 1], strides = [1, 1, 1]} : vector<2x4x1xf32> to vector<1x4x1xf32>
    %371 = vector.extract_strided_slice %369 {offsets = [1, 0, 0], sizes = [1, 4, 1], strides = [1, 1, 1]} : vector<2x4x1xf32> to vector<1x4x1xf32>
    %372 = arith.addf %370, %371 : vector<1x4x1xf32>
    %cst_55 = arith.constant 0.001953125 : f32
    %373 = vector.broadcast %cst_55 : f32 to vector<1x4x1xf32>
    %374 = arith.mulf %372, %373 : vector<1x4x1xf32>
    %375 = vector.broadcast %374 : vector<1x4x1xf32> to vector<2x4x256xf32>
    %376 = arith.subf %366, %375 : vector<2x4x256xf32>
    %377 = arith.mulf %376, %376 : vector<2x4x256xf32>
    %cst_56 = arith.constant dense<0.000000e+00> : vector<2x4xf32>
    %378 = vector.multi_reduction <add>, %377, %cst_56 [2] : vector<2x4x256xf32> to vector<2x4xf32>
    %379 = vector.shape_cast %378 : vector<2x4xf32> to vector<2x4x1xf32>
    %380 = vector.extract_strided_slice %379 {offsets = [0, 0, 0], sizes = [1, 4, 1], strides = [1, 1, 1]} : vector<2x4x1xf32> to vector<1x4x1xf32>
    %381 = vector.extract_strided_slice %379 {offsets = [1, 0, 0], sizes = [1, 4, 1], strides = [1, 1, 1]} : vector<2x4x1xf32> to vector<1x4x1xf32>
    %382 = arith.addf %380, %381 : vector<1x4x1xf32>
    %cst_57 = arith.constant 0.001953125 : f32
    %383 = vector.broadcast %cst_57 : f32 to vector<1x4x1xf32>
    %384 = arith.mulf %382, %383 : vector<1x4x1xf32>
    %cst_58 = arith.constant 0.000000e+00 : f32
    %385 = vector.broadcast %cst_58 : f32 to vector<1x4x1xf32>
    %386 = arith.maximumf %384, %385 : vector<1x4x1xf32>
    %387 = vector.extract_strided_slice %367 {offsets = [0, 0, 0], sizes = [1, 4, 1], strides = [1, 1, 1]} : vector<2x4x1xf32> to vector<1x4x1xf32>
    %388 = vector.shape_cast %387 : vector<1x4x1xf32> to vector<4x1xf32>
    %cst_59 = arith.constant 9.99999974E-6 : f32
    %389 = vector.broadcast %cst_59 : f32 to vector<1x4x1xf32>
    %390 = arith.addf %386, %389 : vector<1x4x1xf32>
    %391 = math.rsqrt %390 : vector<1x4x1xf32>
    %392 = vector.broadcast %391 : vector<1x4x1xf32> to vector<2x4x256xf32>
    %393 = arith.mulf %376, %392 : vector<2x4x256xf32>
    %394 = vector.shape_cast %388 : vector<4x1xf32> to vector<1x4x1xf32>
    %395 = vector.broadcast %394 : vector<1x4x1xf32> to vector<2x4x256xf32>
    %396 = arith.mulf %395, %393 : vector<2x4x256xf32>
    %397 = vector.extract_strided_slice %367 {offsets = [1, 0, 0], sizes = [1, 4, 1], strides = [1, 1, 1]} : vector<2x4x1xf32> to vector<1x4x1xf32>
    %398 = vector.shape_cast %397 : vector<1x4x1xf32> to vector<4x1xf32>
    %399 = vector.shape_cast %398 : vector<4x1xf32> to vector<1x4x1xf32>
    %400 = vector.broadcast %399 : vector<1x4x1xf32> to vector<2x4x256xf32>
    %401 = arith.addf %396, %400 : vector<2x4x256xf32>
    %c0_60 = arith.constant 0 : index
    %c0_61 = arith.constant 0 : index
    %c0_62 = arith.constant 0 : index
    %402 = vector.load %arg7[%c0_60, %c0_61, %c0_62] : memref<3x4x1xf32, #tpu.memory_space<vmem>>, vector<3x4x1xf32>
    %403 = vector.extract_strided_slice %401 {offsets = [0, 0, 0], sizes = [1, 4, 256], strides = [1, 1, 1]} : vector<2x4x256xf32> to vector<1x4x256xf32>
    %404 = vector.shape_cast %403 : vector<1x4x256xf32> to vector<4x256xf32>
    %c1_i32_63 = arith.constant 1 : i32
    %405 = tpu.dynamic_rotate %404 by %c1_i32_63 dim 1 : vector<4x256xf32>, i32 -> vector<4x256xf32>
    %406 = vector.shape_cast %405 : vector<4x256xf32> to vector<1x4x256xf32>
    %407 = vector.extract_strided_slice %401 {offsets = [1, 0, 0], sizes = [1, 4, 256], strides = [1, 1, 1]} : vector<2x4x256xf32> to vector<1x4x256xf32>
    %408 = vector.shape_cast %407 : vector<1x4x256xf32> to vector<4x256xf32>
    %c1_i32_64 = arith.constant 1 : i32
    %409 = tpu.dynamic_rotate %408 by %c1_i32_64 dim 1 : vector<4x256xf32>, i32 -> vector<4x256xf32>
    %410 = vector.shape_cast %409 : vector<4x256xf32> to vector<1x4x256xf32>
    %411 = tpu.concatenate %406, %410 in 0 : vector<1x4x256xf32>, vector<1x4x256xf32> -> vector<2x4x256xf32>
    %412 = vector.shape_cast %4 : vector<1x256xf32> to vector<1x1x256xf32>
    %413 = vector.broadcast %412 : vector<1x1x256xf32> to vector<2x4x256xf32>
    %414 = arith.mulf %411, %413 : vector<2x4x256xf32>
    %415 = vector.extract_strided_slice %401 {offsets = [0, 0, 0], sizes = [1, 4, 256], strides = [1, 1, 1]} : vector<2x4x256xf32> to vector<1x4x256xf32>
    %416 = vector.shape_cast %415 : vector<1x4x256xf32> to vector<4x256xf32>
    %c255_i32_65 = arith.constant 255 : i32
    %417 = tpu.dynamic_rotate %416 by %c255_i32_65 dim 1 : vector<4x256xf32>, i32 -> vector<4x256xf32>
    %418 = vector.shape_cast %417 : vector<4x256xf32> to vector<1x4x256xf32>
    %419 = vector.extract_strided_slice %401 {offsets = [1, 0, 0], sizes = [1, 4, 256], strides = [1, 1, 1]} : vector<2x4x256xf32> to vector<1x4x256xf32>
    %420 = vector.shape_cast %419 : vector<1x4x256xf32> to vector<4x256xf32>
    %c255_i32_66 = arith.constant 255 : i32
    %421 = tpu.dynamic_rotate %420 by %c255_i32_66 dim 1 : vector<4x256xf32>, i32 -> vector<4x256xf32>
    %422 = vector.shape_cast %421 : vector<4x256xf32> to vector<1x4x256xf32>
    %423 = tpu.concatenate %418, %422 in 0 : vector<1x4x256xf32>, vector<1x4x256xf32> -> vector<2x4x256xf32>
    %424 = vector.shape_cast %5 : vector<1x256xf32> to vector<1x1x256xf32>
    %425 = vector.broadcast %424 : vector<1x1x256xf32> to vector<2x4x256xf32>
    %426 = arith.mulf %423, %425 : vector<2x4x256xf32>
    %427 = vector.extract_strided_slice %402 {offsets = [0, 0, 0], sizes = [1, 4, 1], strides = [1, 1, 1]} : vector<3x4x1xf32> to vector<1x4x1xf32>
    %428 = vector.shape_cast %427 : vector<1x4x1xf32> to vector<4x1xf32>
    %429 = vector.shape_cast %428 : vector<4x1xf32> to vector<1x4x1xf32>
    %430 = vector.broadcast %429 : vector<1x4x1xf32> to vector<2x4x256xf32>
    %431 = arith.mulf %430, %414 : vector<2x4x256xf32>
    %432 = vector.extract_strided_slice %402 {offsets = [1, 0, 0], sizes = [1, 4, 1], strides = [1, 1, 1]} : vector<3x4x1xf32> to vector<1x4x1xf32>
    %433 = vector.shape_cast %432 : vector<1x4x1xf32> to vector<4x1xf32>
    %434 = vector.shape_cast %433 : vector<4x1xf32> to vector<1x4x1xf32>
    %435 = vector.broadcast %434 : vector<1x4x1xf32> to vector<2x4x256xf32>
    %436 = arith.mulf %435, %401 : vector<2x4x256xf32>
    %437 = arith.addf %431, %436 : vector<2x4x256xf32>
    %438 = vector.extract_strided_slice %402 {offsets = [2, 0, 0], sizes = [1, 4, 1], strides = [1, 1, 1]} : vector<3x4x1xf32> to vector<1x4x1xf32>
    %439 = vector.shape_cast %438 : vector<1x4x1xf32> to vector<4x1xf32>
    %440 = vector.shape_cast %439 : vector<4x1xf32> to vector<1x4x1xf32>
    %441 = vector.broadcast %440 : vector<1x4x1xf32> to vector<2x4x256xf32>
    %442 = arith.mulf %441, %426 : vector<2x4x256xf32>
    %443 = arith.addf %437, %442 : vector<2x4x256xf32>
    %cst_67 = arith.constant dense<0.000000e+00> : vector<2x4xf32>
    %444 = vector.multi_reduction <add>, %443, %cst_67 [2] : vector<2x4x256xf32> to vector<2x4xf32>
    %445 = vector.shape_cast %444 : vector<2x4xf32> to vector<2x4x1xf32>
    %cst_68 = arith.constant 3.906250e-03 : f32
    %446 = vector.broadcast %cst_68 : f32 to vector<2x4x1xf32>
    %447 = arith.mulf %445, %446 : vector<2x4x1xf32>
    %c0_69 = arith.constant 0 : index
    %c0_70 = arith.constant 0 : index
    %c0_71 = arith.constant 0 : index
    %448 = vector.load %arg2[%c0_69, %c0_70, %c0_71] : memref<4x4x1xf32, #tpu.memory_space<vmem>>, vector<4x4x1xf32>
    %449 = vector.extract_strided_slice %448 {offsets = [0, 0, 0], sizes = [1, 4, 1], strides = [1, 1, 1]} : vector<4x4x1xf32> to vector<1x4x1xf32>
    %450 = vector.shape_cast %449 : vector<1x4x1xf32> to vector<4x1xf32>
    %451 = vector.extract_strided_slice %447 {offsets = [0, 0, 0], sizes = [2, 1, 1], strides = [1, 1, 1]} : vector<2x4x1xf32> to vector<2x1x1xf32>
    %452 = vector.shape_cast %450 : vector<4x1xf32> to vector<1x4x1xf32>
    %453 = vector.broadcast %452 : vector<1x4x1xf32> to vector<2x4x1xf32>
    %454 = vector.broadcast %451 : vector<2x1x1xf32> to vector<2x4x1xf32>
    %455 = arith.mulf %453, %454 : vector<2x4x1xf32>
    %456 = vector.extract_strided_slice %448 {offsets = [1, 0, 0], sizes = [1, 4, 1], strides = [1, 1, 1]} : vector<4x4x1xf32> to vector<1x4x1xf32>
    %457 = vector.shape_cast %456 : vector<1x4x1xf32> to vector<4x1xf32>
    %458 = vector.extract_strided_slice %447 {offsets = [0, 1, 0], sizes = [2, 1, 1], strides = [1, 1, 1]} : vector<2x4x1xf32> to vector<2x1x1xf32>
    %459 = vector.shape_cast %457 : vector<4x1xf32> to vector<1x4x1xf32>
    %460 = vector.broadcast %459 : vector<1x4x1xf32> to vector<2x4x1xf32>
    %461 = vector.broadcast %458 : vector<2x1x1xf32> to vector<2x4x1xf32>
    %462 = arith.mulf %460, %461 : vector<2x4x1xf32>
    %463 = arith.addf %455, %462 : vector<2x4x1xf32>
    %464 = vector.extract_strided_slice %448 {offsets = [2, 0, 0], sizes = [1, 4, 1], strides = [1, 1, 1]} : vector<4x4x1xf32> to vector<1x4x1xf32>
    %465 = vector.shape_cast %464 : vector<1x4x1xf32> to vector<4x1xf32>
    %466 = vector.extract_strided_slice %447 {offsets = [0, 2, 0], sizes = [2, 1, 1], strides = [1, 1, 1]} : vector<2x4x1xf32> to vector<2x1x1xf32>
    %467 = vector.shape_cast %465 : vector<4x1xf32> to vector<1x4x1xf32>
    %468 = vector.broadcast %467 : vector<1x4x1xf32> to vector<2x4x1xf32>
    %469 = vector.broadcast %466 : vector<2x1x1xf32> to vector<2x4x1xf32>
    %470 = arith.mulf %468, %469 : vector<2x4x1xf32>
    %471 = arith.addf %463, %470 : vector<2x4x1xf32>
    %472 = vector.extract_strided_slice %448 {offsets = [3, 0, 0], sizes = [1, 4, 1], strides = [1, 1, 1]} : vector<4x4x1xf32> to vector<1x4x1xf32>
    %473 = vector.shape_cast %472 : vector<1x4x1xf32> to vector<4x1xf32>
    %474 = vector.extract_strided_slice %447 {offsets = [0, 3, 0], sizes = [2, 1, 1], strides = [1, 1, 1]} : vector<2x4x1xf32> to vector<2x1x1xf32>
    %475 = vector.shape_cast %473 : vector<4x1xf32> to vector<1x4x1xf32>
    %476 = vector.broadcast %475 : vector<1x4x1xf32> to vector<2x4x1xf32>
    %477 = vector.broadcast %474 : vector<2x1x1xf32> to vector<2x4x1xf32>
    %478 = arith.mulf %476, %477 : vector<2x4x1xf32>
    %479 = arith.addf %471, %478 : vector<2x4x1xf32>
    %cst_72 = arith.constant 0.000000e+00 : f32
    %480 = vector.broadcast %cst_72 : f32 to vector<2x4x1xf32>
    %481 = arith.subf %480, %479 : vector<2x4x1xf32>
    %482 = math.exp %481 : vector<2x4x1xf32>
    %cst_73 = arith.constant 1.000000e+00 : f32
    %483 = vector.broadcast %cst_73 : f32 to vector<2x4x1xf32>
    %484 = arith.addf %483, %482 : vector<2x4x1xf32>
    %cst_74 = arith.constant 1.000000e+00 : f32
    %485 = vector.broadcast %cst_74 : f32 to vector<2x4x1xf32>
    %486 = arith.divf %485, %484 : vector<2x4x1xf32>
    %487 = vector.broadcast %486 : vector<2x4x1xf32> to vector<2x4x256xf32>
    %488 = arith.mulf %443, %487 : vector<2x4x256xf32>
    %c0_75 = arith.constant 0 : index
    %c0_76 = arith.constant 0 : index
    %c0_77 = arith.constant 0 : index
    %489 = vector.load %arg13[%c0_75, %c0_76, %c0_77] : memref<2x4x1xf32, #tpu.memory_space<vmem>>, vector<2x4x1xf32>
    %cst_78 = arith.constant dense<0.000000e+00> : vector<2x4xf32>
    %490 = vector.multi_reduction <add>, %488, %cst_78 [2] : vector<2x4x256xf32> to vector<2x4xf32>
    %491 = vector.shape_cast %490 : vector<2x4xf32> to vector<2x4x1xf32>
    %492 = vector.extract_strided_slice %491 {offsets = [0, 0, 0], sizes = [1, 4, 1], strides = [1, 1, 1]} : vector<2x4x1xf32> to vector<1x4x1xf32>
    %493 = vector.extract_strided_slice %491 {offsets = [1, 0, 0], sizes = [1, 4, 1], strides = [1, 1, 1]} : vector<2x4x1xf32> to vector<1x4x1xf32>
    %494 = arith.addf %492, %493 : vector<1x4x1xf32>
    %cst_79 = arith.constant 0.001953125 : f32
    %495 = vector.broadcast %cst_79 : f32 to vector<1x4x1xf32>
    %496 = arith.mulf %494, %495 : vector<1x4x1xf32>
    %497 = vector.broadcast %496 : vector<1x4x1xf32> to vector<2x4x256xf32>
    %498 = arith.subf %488, %497 : vector<2x4x256xf32>
    %499 = arith.mulf %498, %498 : vector<2x4x256xf32>
    %cst_80 = arith.constant dense<0.000000e+00> : vector<2x4xf32>
    %500 = vector.multi_reduction <add>, %499, %cst_80 [2] : vector<2x4x256xf32> to vector<2x4xf32>
    %501 = vector.shape_cast %500 : vector<2x4xf32> to vector<2x4x1xf32>
    %502 = vector.extract_strided_slice %501 {offsets = [0, 0, 0], sizes = [1, 4, 1], strides = [1, 1, 1]} : vector<2x4x1xf32> to vector<1x4x1xf32>
    %503 = vector.extract_strided_slice %501 {offsets = [1, 0, 0], sizes = [1, 4, 1], strides = [1, 1, 1]} : vector<2x4x1xf32> to vector<1x4x1xf32>
    %504 = arith.addf %502, %503 : vector<1x4x1xf32>
    %cst_81 = arith.constant 0.001953125 : f32
    %505 = vector.broadcast %cst_81 : f32 to vector<1x4x1xf32>
    %506 = arith.mulf %504, %505 : vector<1x4x1xf32>
    %cst_82 = arith.constant 0.000000e+00 : f32
    %507 = vector.broadcast %cst_82 : f32 to vector<1x4x1xf32>
    %508 = arith.maximumf %506, %507 : vector<1x4x1xf32>
    %509 = vector.extract_strided_slice %489 {offsets = [0, 0, 0], sizes = [1, 4, 1], strides = [1, 1, 1]} : vector<2x4x1xf32> to vector<1x4x1xf32>
    %510 = vector.shape_cast %509 : vector<1x4x1xf32> to vector<4x1xf32>
    %cst_83 = arith.constant 9.99999974E-6 : f32
    %511 = vector.broadcast %cst_83 : f32 to vector<1x4x1xf32>
    %512 = arith.addf %508, %511 : vector<1x4x1xf32>
    %513 = math.rsqrt %512 : vector<1x4x1xf32>
    %514 = vector.broadcast %513 : vector<1x4x1xf32> to vector<2x4x256xf32>
    %515 = arith.mulf %498, %514 : vector<2x4x256xf32>
    %516 = vector.shape_cast %510 : vector<4x1xf32> to vector<1x4x1xf32>
    %517 = vector.broadcast %516 : vector<1x4x1xf32> to vector<2x4x256xf32>
    %518 = arith.mulf %517, %515 : vector<2x4x256xf32>
    %519 = vector.extract_strided_slice %489 {offsets = [1, 0, 0], sizes = [1, 4, 1], strides = [1, 1, 1]} : vector<2x4x1xf32> to vector<1x4x1xf32>
    %520 = vector.shape_cast %519 : vector<1x4x1xf32> to vector<4x1xf32>
    %521 = vector.shape_cast %520 : vector<4x1xf32> to vector<1x4x1xf32>
    %522 = vector.broadcast %521 : vector<1x4x1xf32> to vector<2x4x256xf32>
    %523 = arith.addf %518, %522 : vector<2x4x256xf32>
    %c0_84 = arith.constant 0 : index
    %c0_85 = arith.constant 0 : index
    %c0_86 = arith.constant 0 : index
    %524 = vector.load %arg8[%c0_84, %c0_85, %c0_86] : memref<4x16x1xf32, #tpu.memory_space<vmem>>, vector<4x16x1xf32>
    %525 = vector.extract_strided_slice %524 {offsets = [0, 0, 0], sizes = [1, 16, 1], strides = [1, 1, 1]} : vector<4x16x1xf32> to vector<1x16x1xf32>
    %526 = vector.shape_cast %525 : vector<1x16x1xf32> to vector<16x1xf32>
    %527 = vector.extract_strided_slice %523 {offsets = [0, 0, 0], sizes = [2, 1, 256], strides = [1, 1, 1]} : vector<2x4x256xf32> to vector<2x1x256xf32>
    %528 = vector.shape_cast %526 : vector<16x1xf32> to vector<1x16x1xf32>
    %529 = vector.broadcast %528 : vector<1x16x1xf32> to vector<2x16x256xf32>
    %530 = vector.broadcast %527 : vector<2x1x256xf32> to vector<2x16x256xf32>
    %531 = arith.mulf %529, %530 : vector<2x16x256xf32>
    %532 = vector.extract_strided_slice %524 {offsets = [1, 0, 0], sizes = [1, 16, 1], strides = [1, 1, 1]} : vector<4x16x1xf32> to vector<1x16x1xf32>
    %533 = vector.shape_cast %532 : vector<1x16x1xf32> to vector<16x1xf32>
    %534 = vector.extract_strided_slice %523 {offsets = [0, 1, 0], sizes = [2, 1, 256], strides = [1, 1, 1]} : vector<2x4x256xf32> to vector<2x1x256xf32>
    %535 = vector.shape_cast %533 : vector<16x1xf32> to vector<1x16x1xf32>
    %536 = vector.broadcast %535 : vector<1x16x1xf32> to vector<2x16x256xf32>
    %537 = vector.broadcast %534 : vector<2x1x256xf32> to vector<2x16x256xf32>
    %538 = arith.mulf %536, %537 : vector<2x16x256xf32>
    %539 = arith.addf %531, %538 : vector<2x16x256xf32>
    %540 = vector.extract_strided_slice %524 {offsets = [2, 0, 0], sizes = [1, 16, 1], strides = [1, 1, 1]} : vector<4x16x1xf32> to vector<1x16x1xf32>
    %541 = vector.shape_cast %540 : vector<1x16x1xf32> to vector<16x1xf32>
    %542 = vector.extract_strided_slice %523 {offsets = [0, 2, 0], sizes = [2, 1, 256], strides = [1, 1, 1]} : vector<2x4x256xf32> to vector<2x1x256xf32>
    %543 = vector.shape_cast %541 : vector<16x1xf32> to vector<1x16x1xf32>
    %544 = vector.broadcast %543 : vector<1x16x1xf32> to vector<2x16x256xf32>
    %545 = vector.broadcast %542 : vector<2x1x256xf32> to vector<2x16x256xf32>
    %546 = arith.mulf %544, %545 : vector<2x16x256xf32>
    %547 = arith.addf %539, %546 : vector<2x16x256xf32>
    %548 = vector.extract_strided_slice %524 {offsets = [3, 0, 0], sizes = [1, 16, 1], strides = [1, 1, 1]} : vector<4x16x1xf32> to vector<1x16x1xf32>
    %549 = vector.shape_cast %548 : vector<1x16x1xf32> to vector<16x1xf32>
    %550 = vector.extract_strided_slice %523 {offsets = [0, 3, 0], sizes = [2, 1, 256], strides = [1, 1, 1]} : vector<2x4x256xf32> to vector<2x1x256xf32>
    %551 = vector.shape_cast %549 : vector<16x1xf32> to vector<1x16x1xf32>
    %552 = vector.broadcast %551 : vector<1x16x1xf32> to vector<2x16x256xf32>
    %553 = vector.broadcast %550 : vector<2x1x256xf32> to vector<2x16x256xf32>
    %554 = arith.mulf %552, %553 : vector<2x16x256xf32>
    %555 = arith.addf %547, %554 : vector<2x16x256xf32>
    %c0_87 = arith.constant 0 : index
    %c0_88 = arith.constant 0 : index
    %c0_89 = arith.constant 0 : index
    %556 = vector.load %arg14[%c0_87, %c0_88, %c0_89] : memref<2x16x1xf32, #tpu.memory_space<vmem>>, vector<2x16x1xf32>
    %cst_90 = arith.constant dense<0.000000e+00> : vector<2x16xf32>
    %557 = vector.multi_reduction <add>, %555, %cst_90 [2] : vector<2x16x256xf32> to vector<2x16xf32>
    %558 = vector.shape_cast %557 : vector<2x16xf32> to vector<2x16x1xf32>
    %559 = vector.extract_strided_slice %558 {offsets = [0, 0, 0], sizes = [1, 16, 1], strides = [1, 1, 1]} : vector<2x16x1xf32> to vector<1x16x1xf32>
    %560 = vector.extract_strided_slice %558 {offsets = [1, 0, 0], sizes = [1, 16, 1], strides = [1, 1, 1]} : vector<2x16x1xf32> to vector<1x16x1xf32>
    %561 = arith.addf %559, %560 : vector<1x16x1xf32>
    %cst_91 = arith.constant 0.001953125 : f32
    %562 = vector.broadcast %cst_91 : f32 to vector<1x16x1xf32>
    %563 = arith.mulf %561, %562 : vector<1x16x1xf32>
    %564 = vector.broadcast %563 : vector<1x16x1xf32> to vector<2x16x256xf32>
    %565 = arith.subf %555, %564 : vector<2x16x256xf32>
    %566 = arith.mulf %565, %565 : vector<2x16x256xf32>
    %cst_92 = arith.constant dense<0.000000e+00> : vector<2x16xf32>
    %567 = vector.multi_reduction <add>, %566, %cst_92 [2] : vector<2x16x256xf32> to vector<2x16xf32>
    %568 = vector.shape_cast %567 : vector<2x16xf32> to vector<2x16x1xf32>
    %569 = vector.extract_strided_slice %568 {offsets = [0, 0, 0], sizes = [1, 16, 1], strides = [1, 1, 1]} : vector<2x16x1xf32> to vector<1x16x1xf32>
    %570 = vector.extract_strided_slice %568 {offsets = [1, 0, 0], sizes = [1, 16, 1], strides = [1, 1, 1]} : vector<2x16x1xf32> to vector<1x16x1xf32>
    %571 = arith.addf %569, %570 : vector<1x16x1xf32>
    %cst_93 = arith.constant 0.001953125 : f32
    %572 = vector.broadcast %cst_93 : f32 to vector<1x16x1xf32>
    %573 = arith.mulf %571, %572 : vector<1x16x1xf32>
    %cst_94 = arith.constant 0.000000e+00 : f32
    %574 = vector.broadcast %cst_94 : f32 to vector<1x16x1xf32>
    %575 = arith.maximumf %573, %574 : vector<1x16x1xf32>
    %576 = vector.extract_strided_slice %556 {offsets = [0, 0, 0], sizes = [1, 16, 1], strides = [1, 1, 1]} : vector<2x16x1xf32> to vector<1x16x1xf32>
    %577 = vector.shape_cast %576 : vector<1x16x1xf32> to vector<16x1xf32>
    %cst_95 = arith.constant 9.99999974E-6 : f32
    %578 = vector.broadcast %cst_95 : f32 to vector<1x16x1xf32>
    %579 = arith.addf %575, %578 : vector<1x16x1xf32>
    %580 = math.rsqrt %579 : vector<1x16x1xf32>
    %581 = vector.broadcast %580 : vector<1x16x1xf32> to vector<2x16x256xf32>
    %582 = arith.mulf %565, %581 : vector<2x16x256xf32>
    %583 = vector.shape_cast %577 : vector<16x1xf32> to vector<1x16x1xf32>
    %584 = vector.broadcast %583 : vector<1x16x1xf32> to vector<2x16x256xf32>
    %585 = arith.mulf %584, %582 : vector<2x16x256xf32>
    %586 = vector.extract_strided_slice %556 {offsets = [1, 0, 0], sizes = [1, 16, 1], strides = [1, 1, 1]} : vector<2x16x1xf32> to vector<1x16x1xf32>
    %587 = vector.shape_cast %586 : vector<1x16x1xf32> to vector<16x1xf32>
    %588 = vector.shape_cast %587 : vector<16x1xf32> to vector<1x16x1xf32>
    %589 = vector.broadcast %588 : vector<1x16x1xf32> to vector<2x16x256xf32>
    %590 = arith.addf %585, %589 : vector<2x16x256xf32>
    %591 = arith.addf %590, %159 : vector<2x16x256xf32>
    %cst_96 = arith.constant 0.000000e+00 : f32
    %592 = vector.broadcast %cst_96 : f32 to vector<2x16x256xf32>
    %593 = arith.maximumf %591, %592 : vector<2x16x256xf32>
    %c0_97 = arith.constant 0 : index
    %c0_98 = arith.constant 0 : index
    %c0_99 = arith.constant 0 : index
    %594 = vector.load %arg15[%c0_97, %c0_98, %c0_99] : memref<2x16x256xf32, #tpu.memory_space<vmem>>, vector<2x16x256xf32>
    tpu.vector_store %arg15[%c0_97, %c0_98, %c0_99], %593 {strides = array<i32>} : memref<2x16x256xf32, #tpu.memory_space<vmem>>, vector<2x16x256xf32>,
    return
  }
}

</mosaic_0001>

<llo_original>
// kernel: lfem_forward.1
$region0: #{lfem_forward.1}
  #allocation0 [shape = 'u32[]', space=smem, size = 0x4, offset = 0x4, fixed_abs, tag = 'smem constant byte address 0x4 - core index']
  #allocation1 [shape = 'u32[144,128]{1,0:T(1,128)}', space=vmem, size = 0x12000, scoped, tag = 'internal scratch']
  %s0 = inlined_call_operand.vmem [shape: f32[2,16,256], index: 0, kind: input, shape index: {}]
  %s1 = inlined_call_operand.vmem [shape: f32[4,256], index: 1, kind: input, shape index: {}]
  %s2 = inlined_call_operand.vmem [shape: f32[4,4,1], index: 2, kind: input, shape index: {}]
  %s3 = inlined_call_operand.vmem [shape: f32[3,16,1], index: 3, kind: input, shape index: {}]
  %s4 = inlined_call_operand.vmem [shape: f32[3,16,1], index: 4, kind: input, shape index: {}]
  %s5 = inlined_call_operand.vmem [shape: f32[16,4,1], index: 5, kind: input, shape index: {}]
  %s6 = inlined_call_operand.vmem [shape: f32[3,4,1], index: 6, kind: input, shape index: {}]
  %s7 = inlined_call_operand.vmem [shape: f32[3,4,1], index: 7, kind: input, shape index: {}]
  %s8 = inlined_call_operand.vmem [shape: f32[4,16,1], index: 8, kind: input, shape index: {}]
  %s9 = inlined_call_operand.vmem [shape: f32[2,16,1], index: 9, kind: input, shape index: {}]
  %s10 = inlined_call_operand.vmem [shape: f32[2,16,1], index: 10, kind: input, shape index: {}]
  %s11 = inlined_call_operand.vmem [shape: f32[2,4,1], index: 11, kind: input, shape index: {}]
  %s12 = inlined_call_operand.vmem [shape: f32[2,4,1], index: 12, kind: input, shape index: {}]
  %s13 = inlined_call_operand.vmem [shape: f32[2,4,1], index: 13, kind: input, shape index: {}]
  %s14 = inlined_call_operand.vmem [shape: f32[2,16,1], index: 14, kind: input, shape index: {}]
  %s15 = inlined_call_operand.vmem [shape: f32[2,16,256], index: 15, kind: output, shape index: {}]
  %s16 = sld [smem:[#allocation0]]
  $region70: #{lfem_forward.1} parent=0
    _
  %s18 = ssub.s32 1, %s16
  %s19 = scalar_select 0, %s18, %s16
  // Predicated region
  $region2: #{lfem_forward.1} parent=0 // pred_check
    _
  $region3: #{lfem_forward.1} parent=0 // pred_check_branch
    %21 = sbr.rel (0) target = $region5
  $region4: #{lfem_forward.1} parent=0 // pred_region
    _
  $region5: #{lfem_forward.1} parent=0 // pred_fallthru
    _
  // Predicated region
  $region6: #{lfem_forward.1} parent=0 // pred_check
    _
  $region7: #{lfem_forward.1} parent=0 // pred_check_branch
    %23 = sbr.rel (0) target = $region9
  $region8: #{lfem_forward.1} parent=0 // pred_region
    _
  $region9: #{lfem_forward.1} parent=0 // pred_fallthru
    _
  // Predicated region
  $region10: #{lfem_forward.1} parent=0 // pred_check
    _
  $region11: #{lfem_forward.1} parent=0 // pred_check_branch
    %25 = sbr.rel (0) target = $region13
  $region12: #{lfem_forward.1} parent=0 // pred_region
    _
  $region13: #{lfem_forward.1} parent=0 // pred_fallthru
    _
  // Predicated region
  $region14: #{lfem_forward.1} parent=0 // pred_check
    _
  $region15: #{lfem_forward.1} parent=0 // pred_check_branch
    %27 = sbr.rel (0) target = $region17
  $region16: #{lfem_forward.1} parent=0 // pred_region
    _
  $region17: #{lfem_forward.1} parent=0 // pred_fallthru
    _
  // Predicated region
  $region18: #{lfem_forward.1} parent=0 // pred_check
    _
  $region19: #{lfem_forward.1} parent=0 // pred_check_branch
    %29 = sbr.rel (0) target = $region21
  $region20: #{lfem_forward.1} parent=0 // pred_region
    _
  $region21: #{lfem_forward.1} parent=0 // pred_fallthru
    _
  // Predicated region
  $region22: #{lfem_forward.1} parent=0 // pred_check
    _
  $region23: #{lfem_forward.1} parent=0 // pred_check_branch
    %31 = sbr.rel (0) target = $region25
  $region24: #{lfem_forward.1} parent=0 // pred_region
    _
  $region25: #{lfem_forward.1} parent=0 // pred_fallthru
    _
  // Predicated region
  $region26: #{lfem_forward.1} parent=0 // pred_check
    _
  $region27: #{lfem_forward.1} parent=0 // pred_check_branch
    %33 = sbr.rel (0) target = $region29
  $region28: #{lfem_forward.1} parent=0 // pred_region
    _
  $region29: #{lfem_forward.1} parent=0 // pred_fallthru
    _
  // Predicated region
  $region30: #{lfem_forward.1} parent=0 // pred_check
    _
  $region31: #{lfem_forward.1} parent=0 // pred_check_branch
    %35 = sbr.rel (0) target = $region33
  $region32: #{lfem_forward.1} parent=0 // pred_region
    _
  $region33: #{lfem_forward.1} parent=0 // pred_fallthru
    _
  // Predicated region
  $region34: #{lfem_forward.1} parent=0 // pred_check
    _
  $region35: #{lfem_forward.1} parent=0 // pred_check_branch
    %37 = sbr.rel (0) target = $region37
  $region36: #{lfem_forward.1} parent=0 // pred_region
    _
  $region37: #{lfem_forward.1} parent=0 // pred_fallthru
    _
  // Predicated region
  $region38: #{lfem_forward.1} parent=0 // pred_check
    _
  $region39: #{lfem_forward.1} parent=0 // pred_check_branch
    %39 = sbr.rel (0) target = $region41
  $region40: #{lfem_forward.1} parent=0 // pred_region
    _
  $region41: #{lfem_forward.1} parent=0 // pred_fallthru
    _
  // Predicated region
  $region42: #{lfem_forward.1} parent=0 // pred_check
    _
  $region43: #{lfem_forward.1} parent=0 // pred_check_branch
    %41 = sbr.rel (0) target = $region45
  $region44: #{lfem_forward.1} parent=0 // pred_region
    _
  $region45: #{lfem_forward.1} parent=0 // pred_fallthru
    _
  // Predicated region
  $region46: #{lfem_forward.1} parent=0 // pred_check
    _
  $region47: #{lfem_forward.1} parent=0 // pred_check_branch
    %43 = sbr.rel (0) target = $region49
  $region48: #{lfem_forward.1} parent=0 // pred_region
    _
  $region49: #{lfem_forward.1} parent=0 // pred_fallthru
    _
  // Predicated region
  $region50: #{lfem_forward.1} parent=0 // pred_check
    _
  $region51: #{lfem_forward.1} parent=0 // pred_check_branch
    %45 = sbr.rel (0) target = $region53
  $region52: #{lfem_forward.1} parent=0 // pred_region
    _
  $region53: #{lfem_forward.1} parent=0 // pred_fallthru
    _
  // Predicated region
  $region54: #{lfem_forward.1} parent=0 // pred_check
    _
  $region55: #{lfem_forward.1} parent=0 // pred_check_branch
    %47 = sbr.rel (0) target = $region57
  $region56: #{lfem_forward.1} parent=0 // pred_region
    _
  $region57: #{lfem_forward.1} parent=0 // pred_fallthru
    _
  // Predicated region
  $region58: #{lfem_forward.1} parent=0 // pred_check
    _
  $region59: #{lfem_forward.1} parent=0 // pred_check_branch
    %49 = sbr.rel (0) target = $region61
  $region60: #{lfem_forward.1} parent=0 // pred_region
    _
  $region61: #{lfem_forward.1} parent=0 // pred_fallthru
    _
  %v50 = vld [vmem:[%s0] sm:$0xff]
  %v51 = vld [vmem:[%s0 + $0x8] sm:$0xff]
  %v52 = vld [vmem:[%s0 + $0x10] sm:$0xff]
  %v53 = vld [vmem:[%s0 + $0x18] sm:$0xff]
  %v54 = vld [vmem:[%s0 + $0x20] sm:$0xff]
  %v55 = vld [vmem:[%s0 + $0x28] sm:$0xff]
  %v56 = vld [vmem:[%s0 + $0x30] sm:$0xff]
  %v57 = vld [vmem:[%s0 + $0x38] sm:$0xff]
  %v58 = vld [vmem:[%s1] sm:$0xff]
  %v59 = vld [vmem:[%s3] sm:$0xff]
  %v60 = vld [vmem:[%s3 + $0x8] sm:$0xff]
  %v61 = vld [vmem:[%s3 + $0x10] sm:$0xff]
  %v62 = vld [vmem:[%s3 + $0x18] sm:$0xff]
  %v63 = vld [vmem:[%s3 + $0x20] sm:$0xff]
  %v64 = vld [vmem:[%s3 + $0x28] sm:$0xff]
  %65 = vrot.lane.b32.xlu0 %v50, 16
  %v66 = vpop.permute.xlu0 %65
  %67 = vrot.lane.b32.xlu0 %v52, 16
  %v68 = vpop.permute.xlu0 %67
  %69 = vrot.lane.b32.xlu0 %v51, 16
  %v70 = vpop.permute.xlu0 %69
  %71 = vrot.lane.b32.xlu0 %v53, 16
  %v72 = vpop.permute.xlu0 %71
  %v73 = vlaneseq
  %v74 = vand.u32 %v73, 127
  %vm75 = vcmp.lt.s32.totalorder %v74, 16
  %v76 = vsel %vm75, %v66, %v70
  %v77 = vsel %vm75, %v68, %v72
  %v78 = vsel %vm75, %v70, %v66
  %v79 = vsel %vm75, %v72, %v68
  %80 = vrot.lane.b32.xlu0 %v54, 16
  %v81 = vpop.permute.xlu0 %80
  %82 = vrot.lane.b32.xlu0 %v56, 16
  %v83 = vpop.permute.xlu0 %82
  %84 = vrot.lane.b32.xlu0 %v55, 16
  %v85 = vpop.permute.xlu0 %84
  %86 = vrot.lane.b32.xlu0 %v57, 16
  %v87 = vpop.permute.xlu0 %86
  %v88 = vsel %vm75, %v81, %v85
  %v89 = vsel %vm75, %v83, %v87
  %v90 = vsel %vm75, %v85, %v81
  %v91 = vsel %vm75, %v87, %v83
  %v93 = vlaneseq
  %v94 = vshrl.u32 %v93, 7
  %v95 = vsub.s32 0, %v94
  %v96 = vrot.slane %v58, %v95
  %v97 = vlaneseq
  %v98 = vshrl.u32 %v97, 7
  %v99 = vsub.s32 4, %v98
  %v100 = vrot.slane %v58, %v99
  %v103 = vlaneseq
  %v104 = vshrl.u32 %v103, 7
  %v105 = vsub.s32 0, %v104
  %v106 = vrot.slane %v96, %v105
  %v107 = vlaneseq
  %v108 = vshrl.u32 %v107, 7
  %v109 = vsub.s32 0, %v108
  %v110 = vrot.slane %v100, %v109
  %v111 = vmul.f32 %v78, %v106
  %v112 = vmul.f32 %v76, %v110
  %v113 = vmul.f32 %v79, %v106
  %v114 = vmul.f32 %v77, %v110
  %v115 = vmul.f32 %v90, %v106
  %v116 = vmul.f32 %v88, %v110
  %v117 = vmul.f32 %v91, %v106
  %v118 = vmul.f32 %v89, %v110
  %119 = vrot.lane.b32.xlu0 %v50, 112
  %v120 = vpop.permute.xlu0 %119
  %121 = vrot.lane.b32.xlu0 %v52, 112
  %v122 = vpop.permute.xlu0 %121
  %123 = vrot.lane.b32.xlu0 %v51, 112
  %v124 = vpop.permute.xlu0 %123
  %125 = vrot.lane.b32.xlu0 %v53, 112
  %v126 = vpop.permute.xlu0 %125
  %vm127 = vcmp.lt.s32.totalorder %v74, 112
  %v128 = vsel %vm127, %v120, %v124
  %v129 = vsel %vm127, %v122, %v126
  %v130 = vsel %vm127, %v124, %v120
  %v131 = vsel %vm127, %v126, %v122
  %132 = vrot.lane.b32.xlu0 %v54, 112
  %v133 = vpop.permute.xlu0 %132
  %134 = vrot.lane.b32.xlu0 %v56, 112
  %v135 = vpop.permute.xlu0 %134
  %136 = vrot.lane.b32.xlu0 %v55, 112
  %v137 = vpop.permute.xlu0 %136
  %138 = vrot.lane.b32.xlu0 %v57, 112
  %v139 = vpop.permute.xlu0 %138
  %v140 = vsel %vm127, %v133, %v137
  %v141 = vsel %vm127, %v135, %v139
  %v142 = vsel %vm127, %v137, %v133
  %v143 = vsel %vm127, %v139, %v135
  %v144 = vlaneseq
  %v145 = vshrl.u32 %v144, 7
  %v146 = vsub.s32 1, %v145
  %v147 = vrot.slane %v58, %v146
  %v148 = vlaneseq
  %v149 = vshrl.u32 %v148, 7
  %v150 = vsub.s32 5, %v149
  %v151 = vrot.slane %v58, %v150
  %v154 = vlaneseq
  %v155 = vshrl.u32 %v154, 7
  %v156 = vsub.s32 1, %v155
  %v157 = vrot.slane %v147, %v156
  %v158 = vlaneseq
  %v159 = vshrl.u32 %v158, 7
  %v160 = vsub.s32 1, %v159
  %v161 = vrot.slane %v151, %v160
  %v162 = vmul.f32 %v128, %v157
  %v163 = vmul.f32 %v130, %v161
  %v164 = vmul.f32 %v129, %v157
  %v165 = vmul.f32 %v131, %v161
  %v166 = vmul.f32 %v140, %v157
  %v167 = vmul.f32 %v142, %v161
  %v168 = vmul.f32 %v141, %v157
  %v169 = vmul.f32 %v143, %v161
  %171 = vset.pattern.permute.xlu0 0
  %172 = vperm.xlu0 %171, %v59
  %v173 = vpop.permute.xlu0 %172
  %176 = vset.pattern.permute.xlu0 0
  %177 = vperm.xlu0 %176, %v60
  %v178 = vpop.permute.xlu0 %177
  %v180 = vmul.f32 %v173, %v111
  %v181 = vmul.f32 %v173, %v112
  %v182 = vmul.f32 %v178, %v113
  %v183 = vmul.f32 %v178, %v114
  %v184 = vmul.f32 %v173, %v115
  %v185 = vmul.f32 %v173, %v116
  %v186 = vmul.f32 %v178, %v117
  %v187 = vmul.f32 %v178, %v118
  %189 = vset.pattern.permute.xlu0 0
  %190 = vperm.xlu0 %189, %v61
  %v191 = vpop.permute.xlu0 %190
  %194 = vset.pattern.permute.xlu0 0
  %195 = vperm.xlu0 %194, %v62
  %v196 = vpop.permute.xlu0 %195
  %v198 = vmul.f32 %v191, %v50
  %v199 = vmul.f32 %v191, %v51
  %v200 = vmul.f32 %v196, %v52
  %v201 = vmul.f32 %v196, %v53
  %v202 = vmul.f32 %v191, %v54
  %v203 = vmul.f32 %v191, %v55
  %v204 = vmul.f32 %v196, %v56
  %v205 = vmul.f32 %v196, %v57
  %v206 = vadd.f32 %v180, %v198
  %v207 = vadd.f32 %v181, %v199
  %v208 = vadd.f32 %v182, %v200
  %v209 = vadd.f32 %v183, %v201
  %v210 = vadd.f32 %v184, %v202
  %v211 = vadd.f32 %v185, %v203
  %v212 = vadd.f32 %v186, %v204
  %v213 = vadd.f32 %v187, %v205
  %215 = vset.pattern.permute.xlu0 0
  %216 = vperm.xlu0 %215, %v63
  %v217 = vpop.permute.xlu0 %216
  %220 = vset.pattern.permute.xlu0 0
  %221 = vperm.xlu0 %220, %v64
  %v222 = vpop.permute.xlu0 %221
  %v224 = vmul.f32 %v217, %v162
  %v225 = vmul.f32 %v217, %v163
  %v226 = vmul.f32 %v222, %v164
  %v227 = vmul.f32 %v222, %v165
  %v228 = vmul.f32 %v217, %v166
  %v229 = vmul.f32 %v217, %v167
  %v230 = vmul.f32 %v222, %v168
  %v231 = vmul.f32 %v222, %v169
  %v232 = vadd.f32 %v206, %v224
  %v233 = vadd.f32 %v207, %v225
  %v234 = vadd.f32 %v208, %v226
  %v235 = vadd.f32 %v209, %v227
  %v236 = vadd.f32 %v210, %v228
  %v237 = vadd.f32 %v211, %v229
  %v238 = vadd.f32 %v212, %v230
  %v239 = vadd.f32 %v213, %v231
  %v240 = vld [vmem:[%s9] sm:$0xff]
  %v241 = vld [vmem:[%s9 + $0x8] sm:$0xff]
  %v242 = vld [vmem:[%s9 + $0x10] sm:$0xff]
  %v243 = vld [vmem:[%s9 + $0x18] sm:$0xff]
  %v244 = vadd.f32 %v232, %v233
  %245 = vadd.xlane.f32.xlu0 %v244
  %v246 = vpop.xlane.xlu0 %245
  %v247 = vadd.f32 %v234, %v235
  %248 = vadd.xlane.f32.xlu0 %v247
  %v249 = vpop.xlane.xlu0 %248
  %v250 = vadd.f32 %v236, %v237
  %251 = vadd.xlane.f32.xlu0 %v250
  %v252 = vpop.xlane.xlu0 %251
  %v253 = vadd.f32 %v238, %v239
  %254 = vadd.xlane.f32.xlu0 %v253
  %v255 = vpop.xlane.xlu0 %254
  %v256 = vadd.f32 %v246, %v252
  %v257 = vadd.f32 %v249, %v255
  %v258 = vmul.f32 %v256, 0.001953125
  %v259 = vmul.f32 %v257, 0.001953125
  %v260 = vsub.f32 %v232, %v258
  %v261 = vsub.f32 %v233, %v258
  %v262 = vsub.f32 %v234, %v259
  %v263 = vsub.f32 %v235, %v259
  %v264 = vsub.f32 %v236, %v258
  %v265 = vsub.f32 %v237, %v258
  %v266 = vsub.f32 %v238, %v259
  %v267 = vsub.f32 %v239, %v259
  %v268 = vmul.f32 %v260, %v260
  %v269 = vmul.f32 %v261, %v261
  %v270 = vmul.f32 %v262, %v262
  %v271 = vmul.f32 %v263, %v263
  %v272 = vmul.f32 %v264, %v264
  %v273 = vmul.f32 %v265, %v265
  %v274 = vmul.f32 %v266, %v266
  %v275 = vmul.f32 %v267, %v267
  %v276 = vadd.f32 %v268, %v269
  %277 = vadd.xlane.f32.xlu0 %v276
  %v278 = vpop.xlane.xlu0 %277
  %v279 = vadd.f32 %v270, %v271
  %280 = vadd.xlane.f32.xlu0 %v279
  %v281 = vpop.xlane.xlu0 %280
  %v282 = vadd.f32 %v272, %v273
  %283 = vadd.xlane.f32.xlu0 %v282
  %v284 = vpop.xlane.xlu0 %283
  %v285 = vadd.f32 %v274, %v275
  %286 = vadd.xlane.f32.xlu0 %v285
  %v287 = vpop.xlane.xlu0 %286
  %v288 = vadd.f32 %v278, %v284
  %v289 = vadd.f32 %v281, %v287
  %v290 = vmul.f32 %v288, 0.001953125
  %v291 = vmul.f32 %v289, 0.001953125
  %v292 = vmax.f32 %v290, 0.0
  %v293 = vmax.f32 %v291, 0.0
  %v294 = vadd.f32 %v292, 1e-05
  %v295 = vadd.f32 %v293, 1e-05
  %v296 = vrsqrt.pop %v294
  %v297 = vrsqrt.pop %v295
  %v298 = vmul.f32 %v260, %v296
  %v299 = vmul.f32 %v261, %v296
  %v300 = vmul.f32 %v262, %v297
  %v301 = vmul.f32 %v263, %v297
  %v302 = vmul.f32 %v264, %v296
  %v303 = vmul.f32 %v265, %v296
  %v304 = vmul.f32 %v266, %v297
  %v305 = vmul.f32 %v267, %v297
  %307 = vset.pattern.permute.xlu0 0
  %308 = vperm.xlu0 %307, %v240
  %v309 = vpop.permute.xlu0 %308
  %312 = vset.pattern.permute.xlu0 0
  %313 = vperm.xlu0 %312, %v241
  %v314 = vpop.permute.xlu0 %313
  %v316 = vmul.f32 %v309, %v298
  %v317 = vmul.f32 %v309, %v299
  %v318 = vmul.f32 %v314, %v300
  %v319 = vmul.f32 %v314, %v301
  %v320 = vmul.f32 %v309, %v302
  %v321 = vmul.f32 %v309, %v303
  %v322 = vmul.f32 %v314, %v304
  %v323 = vmul.f32 %v314, %v305
  %325 = vset.pattern.permute.xlu0 0
  %326 = vperm.xlu0 %325, %v242
  %v327 = vpop.permute.xlu0 %326
  %330 = vset.pattern.permute.xlu0 0
  %331 = vperm.xlu0 %330, %v243
  %v332 = vpop.permute.xlu0 %331
  %v334 = vadd.f32 %v316, %v327
  %v335 = vadd.f32 %v317, %v327
  %v336 = vadd.f32 %v318, %v332
  %v337 = vadd.f32 %v319, %v332
  %v338 = vadd.f32 %v320, %v327
  %v339 = vadd.f32 %v321, %v327
  %v340 = vadd.f32 %v322, %v332
  %v341 = vadd.f32 %v323, %v332
  %v342 = vld [vmem:[%s4] sm:$0xff]
  %v343 = vld [vmem:[%s4 + $0x8] sm:$0xff]
  %v344 = vld [vmem:[%s4 + $0x10] sm:$0xff]
  %v345 = vld [vmem:[%s4 + $0x18] sm:$0xff]
  %v346 = vld [vmem:[%s4 + $0x20] sm:$0xff]
  %v347 = vld [vmem:[%s4 + $0x28] sm:$0xff]
  %348 = vrot.lane.b32.xlu0 %v334, 1
  %v349 = vpop.permute.xlu0 %348
  %350 = vrot.lane.b32.xlu0 %v336, 1
  %v351 = vpop.permute.xlu0 %350
  %352 = vrot.lane.b32.xlu0 %v335, 1
  %v353 = vpop.permute.xlu0 %352
  %354 = vrot.lane.b32.xlu0 %v337, 1
  %v355 = vpop.permute.xlu0 %354
  %vm356 = vcmp.lt.s32.totalorder %v74, 1
  %v357 = vsel %vm356, %v349, %v353
  %v358 = vsel %vm356, %v351, %v355
  %v359 = vsel %vm356, %v353, %v349
  %v360 = vsel %vm356, %v355, %v351
  %361 = vrot.lane.b32.xlu0 %v338, 1
  %v362 = vpop.permute.xlu0 %361
  %363 = vrot.lane.b32.xlu0 %v340, 1
  %v364 = vpop.permute.xlu0 %363
  %365 = vrot.lane.b32.xlu0 %v339, 1
  %v366 = vpop.permute.xlu0 %365
  %367 = vrot.lane.b32.xlu0 %v341, 1
  %v368 = vpop.permute.xlu0 %367
  %v369 = vsel %vm356, %v362, %v366
  %v370 = vsel %vm356, %v364, %v368
  %v371 = vsel %vm356, %v366, %v362
  %v372 = vsel %vm356, %v368, %v364
  %v373 = vlaneseq
  %v374 = vshrl.u32 %v373, 7
  %v375 = vsub.s32 2, %v374
  %v376 = vrot.slane %v58, %v375
  %v377 = vlaneseq
  %v378 = vshrl.u32 %v377, 7
  %v379 = vsub.s32 6, %v378
  %v380 = vrot.slane %v58, %v379
  %v383 = vlaneseq
  %v384 = vshrl.u32 %v383, 7
  %v385 = vsub.s32 2, %v384
  %v386 = vrot.slane %v376, %v385
  %v387 = vlaneseq
  %v388 = vshrl.u32 %v387, 7
  %v389 = vsub.s32 2, %v388
  %v390 = vrot.slane %v380, %v389
  %v391 = vmul.f32 %v359, %v386
  %v392 = vmul.f32 %v357, %v390
  %v393 = vmul.f32 %v360, %v386
  %v394 = vmul.f32 %v358, %v390
  %v395 = vmul.f32 %v371, %v386
  %v396 = vmul.f32 %v369, %v390
  %v397 = vmul.f32 %v372, %v386
  %v398 = vmul.f32 %v370, %v390
  %399 = vrot.lane.b32.xlu0 %v334, 127
  %v400 = vpop.permute.xlu0 %399
  %401 = vrot.lane.b32.xlu0 %v336, 127
  %v402 = vpop.permute.xlu0 %401
  %403 = vrot.lane.b32.xlu0 %v335, 127
  %v404 = vpop.permute.xlu0 %403
  %405 = vrot.lane.b32.xlu0 %v337, 127
  %v406 = vpop.permute.xlu0 %405
  %vm407 = vcmp.lt.s32.totalorder %v74, 127
  %v408 = vsel %vm407, %v400, %v404
  %v409 = vsel %vm407, %v402, %v406
  %v410 = vsel %vm407, %v404, %v400
  %v411 = vsel %vm407, %v406, %v402
  %412 = vrot.lane.b32.xlu0 %v338, 127
  %v413 = vpop.permute.xlu0 %412
  %414 = vrot.lane.b32.xlu0 %v340, 127
  %v415 = vpop.permute.xlu0 %414
  %416 = vrot.lane.b32.xlu0 %v339, 127
  %v417 = vpop.permute.xlu0 %416
  %418 = vrot.lane.b32.xlu0 %v341, 127
  %v419 = vpop.permute.xlu0 %418
  %v420 = vsel %vm407, %v413, %v417
  %v421 = vsel %vm407, %v415, %v419
  %v422 = vsel %vm407, %v417, %v413
  %v423 = vsel %vm407, %v419, %v415
  %v424 = vlaneseq
  %v425 = vshrl.u32 %v424, 7
  %v426 = vsub.s32 3, %v425
  %v427 = vrot.slane %v58, %v426
  %v428 = vlaneseq
  %v429 = vshrl.u32 %v428, 7
  %v430 = vsub.s32 7, %v429
  %v431 = vrot.slane %v58, %v430
  %v434 = vlaneseq
  %v435 = vshrl.u32 %v434, 7
  %v436 = vsub.s32 3, %v435
  %v437 = vrot.slane %v427, %v436
  %v438 = vlaneseq
  %v439 = vshrl.u32 %v438, 7
  %v440 = vsub.s32 3, %v439
  %v441 = vrot.slane %v431, %v440
  %v442 = vmul.f32 %v408, %v437
  %v443 = vmul.f32 %v410, %v441
  %v444 = vmul.f32 %v409, %v437
  %v445 = vmul.f32 %v411, %v441
  %v446 = vmul.f32 %v420, %v437
  %v447 = vmul.f32 %v422, %v441
  %v448 = vmul.f32 %v421, %v437
  %v449 = vmul.f32 %v423, %v441
  %451 = vset.pattern.permute.xlu0 0
  %452 = vperm.xlu0 %451, %v342
  %v453 = vpop.permute.xlu0 %452
  %456 = vset.pattern.permute.xlu0 0
  %457 = vperm.xlu0 %456, %v343
  %v458 = vpop.permute.xlu0 %457
  %v460 = vmul.f32 %v453, %v391
  %v461 = vmul.f32 %v453, %v392
  %v462 = vmul.f32 %v458, %v393
  %v463 = vmul.f32 %v458, %v394
  %v464 = vmul.f32 %v453, %v395
  %v465 = vmul.f32 %v453, %v396
  %v466 = vmul.f32 %v458, %v397
  %v467 = vmul.f32 %v458, %v398
  %469 = vset.pattern.permute.xlu0 0
  %470 = vperm.xlu0 %469, %v344
  %v471 = vpop.permute.xlu0 %470
  %474 = vset.pattern.permute.xlu0 0
  %475 = vperm.xlu0 %474, %v345
  %v476 = vpop.permute.xlu0 %475
  %v478 = vmul.f32 %v471, %v334
  %v479 = vmul.f32 %v471, %v335
  %v480 = vmul.f32 %v476, %v336
  %v481 = vmul.f32 %v476, %v337
  %v482 = vmul.f32 %v471, %v338
  %v483 = vmul.f32 %v471, %v339
  %v484 = vmul.f32 %v476, %v340
  %v485 = vmul.f32 %v476, %v341
  %v486 = vadd.f32 %v460, %v478
  %v487 = vadd.f32 %v461, %v479
  %v488 = vadd.f32 %v462, %v480
  %v489 = vadd.f32 %v463, %v481
  %v490 = vadd.f32 %v464, %v482
  %v491 = vadd.f32 %v465, %v483
  %v492 = vadd.f32 %v466, %v484
  %v493 = vadd.f32 %v467, %v485
  %495 = vset.pattern.permute.xlu0 0
  %496 = vperm.xlu0 %495, %v346
  %v497 = vpop.permute.xlu0 %496
  %500 = vset.pattern.permute.xlu0 0
  %501 = vperm.xlu0 %500, %v347
  %v502 = vpop.permute.xlu0 %501
  %v504 = vmul.f32 %v497, %v442
  %v505 = vmul.f32 %v497, %v443
  %v506 = vmul.f32 %v502, %v444
  %v507 = vmul.f32 %v502, %v445
  %v508 = vmul.f32 %v497, %v446
  %v509 = vmul.f32 %v497, %v447
  %v510 = vmul.f32 %v502, %v448
  %v511 = vmul.f32 %v502, %v449
  %v512 = vadd.f32 %v486, %v504
  %v513 = vadd.f32 %v487, %v505
  %v514 = vadd.f32 %v488, %v506
  %v515 = vadd.f32 %v489, %v507
  %v516 = vadd.f32 %v490, %v508
  %v517 = vadd.f32 %v491, %v509
  %v518 = vadd.f32 %v492, %v510
  %v519 = vadd.f32 %v493, %v511
  %v520 = vld [vmem:[%s10] sm:$0xff]
  %v521 = vld [vmem:[%s10 + $0x8] sm:$0xff]
  %v522 = vld [vmem:[%s10 + $0x10] sm:$0xff]
  %v523 = vld [vmem:[%s10 + $0x18] sm:$0xff]
  %v524 = vadd.f32 %v512, %v513
  %525 = vadd.xlane.f32.xlu0 %v524
  %v526 = vpop.xlane.xlu0 %525
  %v527 = vadd.f32 %v514, %v515
  %528 = vadd.xlane.f32.xlu0 %v527
  %v529 = vpop.xlane.xlu0 %528
  %v530 = vadd.f32 %v516, %v517
  %531 = vadd.xlane.f32.xlu0 %v530
  %v532 = vpop.xlane.xlu0 %531
  %v533 = vadd.f32 %v518, %v519
  %534 = vadd.xlane.f32.xlu0 %v533
  %v535 = vpop.xlane.xlu0 %534
  %v536 = vadd.f32 %v526, %v532
  %v537 = vadd.f32 %v529, %v535
  %v538 = vmul.f32 %v536, 0.001953125
  %v539 = vmul.f32 %v537, 0.001953125
  %v540 = vsub.f32 %v512, %v538
  %v541 = vsub.f32 %v513, %v538
  %v542 = vsub.f32 %v514, %v539
  %v543 = vsub.f32 %v515, %v539
  %v544 = vsub.f32 %v516, %v538
  %v545 = vsub.f32 %v517, %v538
  %v546 = vsub.f32 %v518, %v539
  %v547 = vsub.f32 %v519, %v539
  %v548 = vmul.f32 %v540, %v540
  %v549 = vmul.f32 %v541, %v541
  %v550 = vmul.f32 %v542, %v542
  %v551 = vmul.f32 %v543, %v543
  %v552 = vmul.f32 %v544, %v544
  %v553 = vmul.f32 %v545, %v545
  %v554 = vmul.f32 %v546, %v546
  %v555 = vmul.f32 %v547, %v547
  %v556 = vadd.f32 %v548, %v549
  %557 = vadd.xlane.f32.xlu0 %v556
  %v558 = vpop.xlane.xlu0 %557
  %v559 = vadd.f32 %v550, %v551
  %560 = vadd.xlane.f32.xlu0 %v559
  %v561 = vpop.xlane.xlu0 %560
  %v562 = vadd.f32 %v552, %v553
  %563 = vadd.xlane.f32.xlu0 %v562
  %v564 = vpop.xlane.xlu0 %563
  %v565 = vadd.f32 %v554, %v555
  %566 = vadd.xlane.f32.xlu0 %v565
  %v567 = vpop.xlane.xlu0 %566
  %v568 = vadd.f32 %v558, %v564
  %v569 = vadd.f32 %v561, %v567
  %v570 = vmul.f32 %v568, 0.001953125
  %v571 = vmul.f32 %v569, 0.001953125
  %v572 = vmax.f32 %v570, 0.0
  %v573 = vmax.f32 %v571, 0.0
  %v574 = vadd.f32 %v572, 1e-05
  %v575 = vadd.f32 %v573, 1e-05
  %v576 = vrsqrt.pop %v574
  %v577 = vrsqrt.pop %v575
  %v578 = vmul.f32 %v540, %v576
  %v579 = vmul.f32 %v541, %v576
  %v580 = vmul.f32 %v542, %v577
  %v581 = vmul.f32 %v543, %v577
  %v582 = vmul.f32 %v544, %v576
  %v583 = vmul.f32 %v545, %v576
  %v584 = vmul.f32 %v546, %v577
  %v585 = vmul.f32 %v547, %v577
  %587 = vset.pattern.permute.xlu0 0
  %588 = vperm.xlu0 %587, %v520
  %v589 = vpop.permute.xlu0 %588
  %592 = vset.pattern.permute.xlu0 0
  %593 = vperm.xlu0 %592, %v521
  %v594 = vpop.permute.xlu0 %593
  %v596 = vmul.f32 %v589, %v578
  %v597 = vmul.f32 %v589, %v579
  %v598 = vmul.f32 %v594, %v580
  %v599 = vmul.f32 %v594, %v581
  %v600 = vmul.f32 %v589, %v582
  %v601 = vmul.f32 %v589, %v583
  %v602 = vmul.f32 %v594, %v584
  %v603 = vmul.f32 %v594, %v585
  %605 = vset.pattern.permute.xlu0 0
  %606 = vperm.xlu0 %605, %v522
  %v607 = vpop.permute.xlu0 %606
  %610 = vset.pattern.permute.xlu0 0
  %611 = vperm.xlu0 %610, %v523
  %v612 = vpop.permute.xlu0 %611
  %v614 = vadd.f32 %v596, %v607
  %v615 = vadd.f32 %v597, %v607
  %v616 = vadd.f32 %v598, %v612
  %v617 = vadd.f32 %v599, %v612
  %v618 = vadd.f32 %v600, %v607
  %v619 = vadd.f32 %v601, %v607
  %v620 = vadd.f32 %v602, %v612
  %v621 = vadd.f32 %v603, %v612
  %v622 = vld [vmem:[%s5] sm:$0xf]
  %v623 = vld [vmem:[%s5 + $0x4] sm:$0xf]
  %v624 = vld [vmem:[%s5 + $0x8] sm:$0xf]
  %v625 = vld [vmem:[%s5 + $0xc] sm:$0xf]
  %v626 = vld [vmem:[%s5 + $0x10] sm:$0xf]
  %v627 = vld [vmem:[%s5 + $0x14] sm:$0xf]
  %v628 = vld [vmem:[%s5 + $0x18] sm:$0xf]
  %v629 = vld [vmem:[%s5 + $0x1c] sm:$0xf]
  %v630 = vld [vmem:[%s5 + $0x20] sm:$0xf]
  %v631 = vld [vmem:[%s5 + $0x24] sm:$0xf]
  %v632 = vld [vmem:[%s5 + $0x28] sm:$0xf]
  %v633 = vld [vmem:[%s5 + $0x2c] sm:$0xf]
  %v634 = vld [vmem:[%s5 + $0x30] sm:$0xf]
  %v635 = vld [vmem:[%s5 + $0x34] sm:$0xf]
  %v636 = vld [vmem:[%s5 + $0x38] sm:$0xf]
  %v637 = vld [vmem:[%s5 + $0x3c] sm:$0xf]
  %639 = vset.pattern.permute.xlu0 0
  %640 = vperm.xlu0 %639, %v622
  %v641 = vpop.permute.xlu0 %640
  %v643 = vlaneseq
  %v644 = vshrl.u32 %v643, 7
  %v645 = vsub.s32 0, %v644
  %v646 = vrot.slane %v50, %v645
  %v647 = vlaneseq
  %v648 = vshrl.u32 %v647, 7
  %v649 = vsub.s32 0, %v648
  %v650 = vrot.slane %v51, %v649
  %v651 = vlaneseq
  %v652 = vshrl.u32 %v651, 7
  %v653 = vsub.s32 0, %v652
  %v654 = vrot.slane %v54, %v653
  %v655 = vlaneseq
  %v656 = vshrl.u32 %v655, 7
  %v657 = vsub.s32 0, %v656
  %v658 = vrot.slane %v55, %v657
  %v659 = vmul.f32 %v641, %v646
  %v660 = vmul.f32 %v641, %v650
  %v661 = vmul.f32 %v641, %v654
  %v662 = vmul.f32 %v641, %v658
  %664 = vset.pattern.permute.xlu0 0
  %665 = vperm.xlu0 %664, %v623
  %v666 = vpop.permute.xlu0 %665
  %v668 = vlaneseq
  %v669 = vshrl.u32 %v668, 7
  %v670 = vsub.s32 1, %v669
  %v671 = vrot.slane %v50, %v670
  %v672 = vlaneseq
  %v673 = vshrl.u32 %v672, 7
  %v674 = vsub.s32 1, %v673
  %v675 = vrot.slane %v51, %v674
  %v676 = vlaneseq
  %v677 = vshrl.u32 %v676, 7
  %v678 = vsub.s32 1, %v677
  %v679 = vrot.slane %v54, %v678
  %v680 = vlaneseq
  %v681 = vshrl.u32 %v680, 7
  %v682 = vsub.s32 1, %v681
  %v683 = vrot.slane %v55, %v682
  %v684 = vmul.f32 %v666, %v671
  %v685 = vmul.f32 %v666, %v675
  %v686 = vmul.f32 %v666, %v679
  %v687 = vmul.f32 %v666, %v683
  %v688 = vadd.f32 %v659, %v684
  %v689 = vadd.f32 %v660, %v685
  %v690 = vadd.f32 %v661, %v686
  %v691 = vadd.f32 %v662, %v687
  %693 = vset.pattern.permute.xlu0 0
  %694 = vperm.xlu0 %693, %v624
  %v695 = vpop.permute.xlu0 %694
  %v697 = vlaneseq
  %v698 = vshrl.u32 %v697, 7
  %v699 = vsub.s32 2, %v698
  %v700 = vrot.slane %v50, %v699
  %v701 = vlaneseq
  %v702 = vshrl.u32 %v701, 7
  %v703 = vsub.s32 2, %v702
  %v704 = vrot.slane %v51, %v703
  %v705 = vlaneseq
  %v706 = vshrl.u32 %v705, 7
  %v707 = vsub.s32 2, %v706
  %v708 = vrot.slane %v54, %v707
  %v709 = vlaneseq
  %v710 = vshrl.u32 %v709, 7
  %v711 = vsub.s32 2, %v710
  %v712 = vrot.slane %v55, %v711
  %v713 = vmul.f32 %v695, %v700
  %v714 = vmul.f32 %v695, %v704
  %v715 = vmul.f32 %v695, %v708
  %v716 = vmul.f32 %v695, %v712
  %v717 = vadd.f32 %v688, %v713
  %v718 = vadd.f32 %v689, %v714
  %v719 = vadd.f32 %v690, %v715
  %v720 = vadd.f32 %v691, %v716
  %722 = vset.pattern.permute.xlu0 0
  %723 = vperm.xlu0 %722, %v625
  %v724 = vpop.permute.xlu0 %723
  %v726 = vlaneseq
  %v727 = vshrl.u32 %v726, 7
  %v728 = vsub.s32 3, %v727
  %v729 = vrot.slane %v50, %v728
  %v730 = vlaneseq
  %v731 = vshrl.u32 %v730, 7
  %v732 = vsub.s32 3, %v731
  %v733 = vrot.slane %v51, %v732
  %v734 = vlaneseq
  %v735 = vshrl.u32 %v734, 7
  %v736 = vsub.s32 3, %v735
  %v737 = vrot.slane %v54, %v736
  %v738 = vlaneseq
  %v739 = vshrl.u32 %v738, 7
  %v740 = vsub.s32 3, %v739
  %v741 = vrot.slane %v55, %v740
  %v742 = vmul.f32 %v724, %v729
  %v743 = vmul.f32 %v724, %v733
  %v744 = vmul.f32 %v724, %v737
  %v745 = vmul.f32 %v724, %v741
  %v746 = vadd.f32 %v717, %v742
  %v747 = vadd.f32 %v718, %v743
  %v748 = vadd.f32 %v719, %v744
  %v749 = vadd.f32 %v720, %v745
  %751 = vset.pattern.permute.xlu0 0
  %752 = vperm.xlu0 %751, %v626
  %v753 = vpop.permute.xlu0 %752
  %v755 = vlaneseq
  %v756 = vshrl.u32 %v755, 7
  %v757 = vsub.s32 4, %v756
  %v758 = vrot.slane %v50, %v757
  %v759 = vlaneseq
  %v760 = vshrl.u32 %v759, 7
  %v761 = vsub.s32 4, %v760
  %v762 = vrot.slane %v51, %v761
  %v763 = vlaneseq
  %v764 = vshrl.u32 %v763, 7
  %v765 = vsub.s32 4, %v764
  %v766 = vrot.slane %v54, %v765
  %v767 = vlaneseq
  %v768 = vshrl.u32 %v767, 7
  %v769 = vsub.s32 4, %v768
  %v770 = vrot.slane %v55, %v769
  %v771 = vmul.f32 %v753, %v758
  %v772 = vmul.f32 %v753, %v762
  %v773 = vmul.f32 %v753, %v766
  %v774 = vmul.f32 %v753, %v770
  %v775 = vadd.f32 %v746, %v771
  %v776 = vadd.f32 %v747, %v772
  %v777 = vadd.f32 %v748, %v773
  %v778 = vadd.f32 %v749, %v774
  %780 = vset.pattern.permute.xlu0 0
  %781 = vperm.xlu0 %780, %v627
  %v782 = vpop.permute.xlu0 %781
  %v784 = vlaneseq
  %v785 = vshrl.u32 %v784, 7
  %v786 = vsub.s32 5, %v785
  %v787 = vrot.slane %v50, %v786
  %v788 = vlaneseq
  %v789 = vshrl.u32 %v788, 7
  %v790 = vsub.s32 5, %v789
  %v791 = vrot.slane %v51, %v790
  %v792 = vlaneseq
  %v793 = vshrl.u32 %v792, 7
  %v794 = vsub.s32 5, %v793
  %v795 = vrot.slane %v54, %v794
  %v796 = vlaneseq
  %v797 = vshrl.u32 %v796, 7
  %v798 = vsub.s32 5, %v797
  %v799 = vrot.slane %v55, %v798
  %v800 = vmul.f32 %v782, %v787
  %v801 = vmul.f32 %v782, %v791
  %v802 = vmul.f32 %v782, %v795
  %v803 = vmul.f32 %v782, %v799
  %v804 = vadd.f32 %v775, %v800
  %v805 = vadd.f32 %v776, %v801
  %v806 = vadd.f32 %v777, %v802
  %v807 = vadd.f32 %v778, %v803
  %809 = vset.pattern.permute.xlu0 0
  %810 = vperm.xlu0 %809, %v628
  %v811 = vpop.permute.xlu0 %810
  %v813 = vlaneseq
  %v814 = vshrl.u32 %v813, 7
  %v815 = vsub.s32 6, %v814
  %v816 = vrot.slane %v50, %v815
  %v817 = vlaneseq
  %v818 = vshrl.u32 %v817, 7
  %v819 = vsub.s32 6, %v818
  %v820 = vrot.slane %v51, %v819
  %v821 = vlaneseq
  %v822 = vshrl.u32 %v821, 7
  %v823 = vsub.s32 6, %v822
  %v824 = vrot.slane %v54, %v823
  %v825 = vlaneseq
  %v826 = vshrl.u32 %v825, 7
  %v827 = vsub.s32 6, %v826
  %v828 = vrot.slane %v55, %v827
  %v829 = vmul.f32 %v811, %v816
  %v830 = vmul.f32 %v811, %v820
  %v831 = vmul.f32 %v811, %v824
  %v832 = vmul.f32 %v811, %v828
  %v833 = vadd.f32 %v804, %v829
  %v834 = vadd.f32 %v805, %v830
  %v835 = vadd.f32 %v806, %v831
  %v836 = vadd.f32 %v807, %v832
  %838 = vset.pattern.permute.xlu0 0
  %839 = vperm.xlu0 %838, %v629
  %v840 = vpop.permute.xlu0 %839
  %v842 = vlaneseq
  %v843 = vshrl.u32 %v842, 7
  %v844 = vsub.s32 7, %v843
  %v845 = vrot.slane %v50, %v844
  %v846 = vlaneseq
  %v847 = vshrl.u32 %v846, 7
  %v848 = vsub.s32 7, %v847
  %v849 = vrot.slane %v51, %v848
  %v850 = vlaneseq
  %v851 = vshrl.u32 %v850, 7
  %v852 = vsub.s32 7, %v851
  %v853 = vrot.slane %v54, %v852
  %v854 = vlaneseq
  %v855 = vshrl.u32 %v854, 7
  %v856 = vsub.s32 7, %v855
  %v857 = vrot.slane %v55, %v856
  %v858 = vmul.f32 %v840, %v845
  %v859 = vmul.f32 %v840, %v849
  %v860 = vmul.f32 %v840, %v853
  %v861 = vmul.f32 %v840, %v857
  %v862 = vadd.f32 %v833, %v858
  %v863 = vadd.f32 %v834, %v859
  %v864 = vadd.f32 %v835, %v860
  %v865 = vadd.f32 %v836, %v861
  %867 = vset.pattern.permute.xlu0 0
  %868 = vperm.xlu0 %867, %v630
  %v869 = vpop.permute.xlu0 %868
  %v871 = vlaneseq
  %v872 = vshrl.u32 %v871, 7
  %v873 = vsub.s32 0, %v872
  %v874 = vrot.slane %v52, %v873
  %v875 = vlaneseq
  %v876 = vshrl.u32 %v875, 7
  %v877 = vsub.s32 0, %v876
  %v878 = vrot.slane %v53, %v877
  %v879 = vlaneseq
  %v880 = vshrl.u32 %v879, 7
  %v881 = vsub.s32 0, %v880
  %v882 = vrot.slane %v56, %v881
  %v883 = vlaneseq
  %v884 = vshrl.u32 %v883, 7
  %v885 = vsub.s32 0, %v884
  %v886 = vrot.slane %v57, %v885
  %v887 = vmul.f32 %v869, %v874
  %v888 = vmul.f32 %v869, %v878
  %v889 = vmul.f32 %v869, %v882
  %v890 = vmul.f32 %v869, %v886
  %v891 = vadd.f32 %v862, %v887
  %v892 = vadd.f32 %v863, %v888
  %v893 = vadd.f32 %v864, %v889
  %v894 = vadd.f32 %v865, %v890
  %896 = vset.pattern.permute.xlu0 0
  %897 = vperm.xlu0 %896, %v631
  %v898 = vpop.permute.xlu0 %897
  %v900 = vlaneseq
  %v901 = vshrl.u32 %v900, 7
  %v902 = vsub.s32 1, %v901
  %v903 = vrot.slane %v52, %v902
  %v904 = vlaneseq
  %v905 = vshrl.u32 %v904, 7
  %v906 = vsub.s32 1, %v905
  %v907 = vrot.slane %v53, %v906
  %v908 = vlaneseq
  %v909 = vshrl.u32 %v908, 7
  %v910 = vsub.s32 1, %v909
  %v911 = vrot.slane %v56, %v910
  %v912 = vlaneseq
  %v913 = vshrl.u32 %v912, 7
  %v914 = vsub.s32 1, %v913
  %v915 = vrot.slane %v57, %v914
  %v916 = vmul.f32 %v898, %v903
  %v917 = vmul.f32 %v898, %v907
  %v918 = vmul.f32 %v898, %v911
  %v919 = vmul.f32 %v898, %v915
  %v920 = vadd.f32 %v891, %v916
  %v921 = vadd.f32 %v892, %v917
  %v922 = vadd.f32 %v893, %v918
  %v923 = vadd.f32 %v894, %v919
  %925 = vset.pattern.permute.xlu0 0
  %926 = vperm.xlu0 %925, %v632
  %v927 = vpop.permute.xlu0 %926
  %v929 = vlaneseq
  %v930 = vshrl.u32 %v929, 7
  %v931 = vsub.s32 2, %v930
  %v932 = vrot.slane %v52, %v931
  %v933 = vlaneseq
  %v934 = vshrl.u32 %v933, 7
  %v935 = vsub.s32 2, %v934
  %v936 = vrot.slane %v53, %v935
  %v937 = vlaneseq
  %v938 = vshrl.u32 %v937, 7
  %v939 = vsub.s32 2, %v938
  %v940 = vrot.slane %v56, %v939
  %v941 = vlaneseq
  %v942 = vshrl.u32 %v941, 7
  %v943 = vsub.s32 2, %v942
  %v944 = vrot.slane %v57, %v943
  %v945 = vmul.f32 %v927, %v932
  %v946 = vmul.f32 %v927, %v936
  %v947 = vmul.f32 %v927, %v940
  %v948 = vmul.f32 %v927, %v944
  %v949 = vadd.f32 %v920, %v945
  %v950 = vadd.f32 %v921, %v946
  %v951 = vadd.f32 %v922, %v947
  %v952 = vadd.f32 %v923, %v948
  %954 = vset.pattern.permute.xlu0 0
  %955 = vperm.xlu0 %954, %v633
  %v956 = vpop.permute.xlu0 %955
  %v958 = vlaneseq
  %v959 = vshrl.u32 %v958, 7
  %v960 = vsub.s32 3, %v959
  %v961 = vrot.slane %v52, %v960
  %v962 = vlaneseq
  %v963 = vshrl.u32 %v962, 7
  %v964 = vsub.s32 3, %v963
  %v965 = vrot.slane %v53, %v964
  %v966 = vlaneseq
  %v967 = vshrl.u32 %v966, 7
  %v968 = vsub.s32 3, %v967
  %v969 = vrot.slane %v56, %v968
  %v970 = vlaneseq
  %v971 = vshrl.u32 %v970, 7
  %v972 = vsub.s32 3, %v971
  %v973 = vrot.slane %v57, %v972
  %v974 = vmul.f32 %v956, %v961
  %v975 = vmul.f32 %v956, %v965
  %v976 = vmul.f32 %v956, %v969
  %v977 = vmul.f32 %v956, %v973
  %v978 = vadd.f32 %v949, %v974
  %v979 = vadd.f32 %v950, %v975
  %v980 = vadd.f32 %v951, %v976
  %v981 = vadd.f32 %v952, %v977
  %983 = vset.pattern.permute.xlu0 0
  %984 = vperm.xlu0 %983, %v634
  %v985 = vpop.permute.xlu0 %984
  %v987 = vlaneseq
  %v988 = vshrl.u32 %v987, 7
  %v989 = vsub.s32 4, %v988
  %v990 = vrot.slane %v52, %v989
  %v991 = vlaneseq
  %v992 = vshrl.u32 %v991, 7
  %v993 = vsub.s32 4, %v992
  %v994 = vrot.slane %v53, %v993
  %v995 = vlaneseq
  %v996 = vshrl.u32 %v995, 7
  %v997 = vsub.s32 4, %v996
  %v998 = vrot.slane %v56, %v997
  %v999 = vlaneseq
  %v1000 = vshrl.u32 %v999, 7
  %v1001 = vsub.s32 4, %v1000
  %v1002 = vrot.slane %v57, %v1001
  %v1003 = vmul.f32 %v985, %v990
  %v1004 = vmul.f32 %v985, %v994
  %v1005 = vmul.f32 %v985, %v998
  %v1006 = vmul.f32 %v985, %v1002
  %v1007 = vadd.f32 %v978, %v1003
  %v1008 = vadd.f32 %v979, %v1004
  %v1009 = vadd.f32 %v980, %v1005
  %v1010 = vadd.f32 %v981, %v1006
  %1012 = vset.pattern.permute.xlu0 0
  %1013 = vperm.xlu0 %1012, %v635
  %v1014 = vpop.permute.xlu0 %1013
  %v1016 = vlaneseq
  %v1017 = vshrl.u32 %v1016, 7
  %v1018 = vsub.s32 5, %v1017
  %v1019 = vrot.slane %v52, %v1018
  %v1020 = vlaneseq
  %v1021 = vshrl.u32 %v1020, 7
  %v1022 = vsub.s32 5, %v1021
  %v1023 = vrot.slane %v53, %v1022
  %v1024 = vlaneseq
  %v1025 = vshrl.u32 %v1024, 7
  %v1026 = vsub.s32 5, %v1025
  %v1027 = vrot.slane %v56, %v1026
  %v1028 = vlaneseq
  %v1029 = vshrl.u32 %v1028, 7
  %v1030 = vsub.s32 5, %v1029
  %v1031 = vrot.slane %v57, %v1030
  %v1032 = vmul.f32 %v1014, %v1019
  %v1033 = vmul.f32 %v1014, %v1023
  %v1034 = vmul.f32 %v1014, %v1027
  %v1035 = vmul.f32 %v1014, %v1031
  %v1036 = vadd.f32 %v1007, %v1032
  %v1037 = vadd.f32 %v1008, %v1033
  %v1038 = vadd.f32 %v1009, %v1034
  %v1039 = vadd.f32 %v1010, %v1035
  %1041 = vset.pattern.permute.xlu0 0
  %1042 = vperm.xlu0 %1041, %v636
  %v1043 = vpop.permute.xlu0 %1042
  %v1045 = vlaneseq
  %v1046 = vshrl.u32 %v1045, 7
  %v1047 = vsub.s32 6, %v1046
  %v1048 = vrot.slane %v52, %v1047
  %v1049 = vlaneseq
  %v1050 = vshrl.u32 %v1049, 7
  %v1051 = vsub.s32 6, %v1050
  %v1052 = vrot.slane %v53, %v1051
  %v1053 = vlaneseq
  %v1054 = vshrl.u32 %v1053, 7
  %v1055 = vsub.s32 6, %v1054
  %v1056 = vrot.slane %v56, %v1055
  %v1057 = vlaneseq
  %v1058 = vshrl.u32 %v1057, 7
  %v1059 = vsub.s32 6, %v1058
  %v1060 = vrot.slane %v57, %v1059
  %v1061 = vmul.f32 %v1043, %v1048
  %v1062 = vmul.f32 %v1043, %v1052
  %v1063 = vmul.f32 %v1043, %v1056
  %v1064 = vmul.f32 %v1043, %v1060
  %v1065 = vadd.f32 %v1036, %v1061
  %v1066 = vadd.f32 %v1037, %v1062
  %v1067 = vadd.f32 %v1038, %v1063
  %v1068 = vadd.f32 %v1039, %v1064
  %1070 = vset.pattern.permute.xlu0 0
  %1071 = vperm.xlu0 %1070, %v637
  %v1072 = vpop.permute.xlu0 %1071
  %v1074 = vlaneseq
  %v1075 = vshrl.u32 %v1074, 7
  %v1076 = vsub.s32 7, %v1075
  %v1077 = vrot.slane %v52, %v1076
  %v1078 = vlaneseq
  %v1079 = vshrl.u32 %v1078, 7
  %v1080 = vsub.s32 7, %v1079
  %v1081 = vrot.slane %v53, %v1080
  %v1082 = vlaneseq
  %v1083 = vshrl.u32 %v1082, 7
  %v1084 = vsub.s32 7, %v1083
  %v1085 = vrot.slane %v56, %v1084
  %v1086 = vlaneseq
  %v1087 = vshrl.u32 %v1086, 7
  %v1088 = vsub.s32 7, %v1087
  %v1089 = vrot.slane %v57, %v1088
  %v1090 = vmul.f32 %v1072, %v1077
  %v1091 = vmul.f32 %v1072, %v1081
  %v1092 = vmul.f32 %v1072, %v1085
  %v1093 = vmul.f32 %v1072, %v1089
  %v1094 = vadd.f32 %v1065, %v1090
  %v1095 = vadd.f32 %v1066, %v1091
  %v1096 = vadd.f32 %v1067, %v1092
  %v1097 = vadd.f32 %v1068, %v1093
  %v1098 = vld [vmem:[%s11] sm:$0xf]
  %v1099 = vld [vmem:[%s11 + $0x4] sm:$0xf]
  %vm1100 = vcmask 1043456
  %v1101 = vsel %vm1100, %v1094, 0.0
  %v1102 = vsel %vm1100, %v1095, 0.0
  %v1103 = vadd.f32 %v1101, %v1102
  %1104 = vadd.xlane.f32.xlu0 %v1103
  %v1105 = vpop.xlane.xlu0 %1104
  %v1106 = vsel %vm1100, %v1096, 0.0
  %v1107 = vsel %vm1100, %v1097, 0.0
  %v1108 = vadd.f32 %v1106, %v1107
  %1109 = vadd.xlane.f32.xlu0 %v1108
  %v1110 = vpop.xlane.xlu0 %1109
  %v1111 = vadd.f32 %v1105, %v1110
  %v1112 = vmul.f32 %v1111, 0.001953125
  %v1113 = vsub.f32 %v1094, %v1112
  %v1114 = vsub.f32 %v1095, %v1112
  %v1115 = vsub.f32 %v1096, %v1112
  %v1116 = vsub.f32 %v1097, %v1112
  %v1117 = vmul.f32 %v1113, %v1113
  %v1118 = vmul.f32 %v1114, %v1114
  %v1119 = vmul.f32 %v1115, %v1115
  %v1120 = vmul.f32 %v1116, %v1116
  %v1121 = vsel %vm1100, %v1117, 0.0
  %v1122 = vsel %vm1100, %v1118, 0.0
  %v1123 = vadd.f32 %v1121, %v1122
  %1124 = vadd.xlane.f32.xlu0 %v1123
  %v1125 = vpop.xlane.xlu0 %1124
  %v1126 = vsel %vm1100, %v1119, 0.0
  %v1127 = vsel %vm1100, %v1120, 0.0
  %v1128 = vadd.f32 %v1126, %v1127
  %1129 = vadd.xlane.f32.xlu0 %v1128
  %v1130 = vpop.xlane.xlu0 %1129
  %v1131 = vadd.f32 %v1125, %v1130
  %v1132 = vmul.f32 %v1131, 0.001953125
  %v1133 = vmax.f32 %v1132, 0.0
  %v1134 = vadd.f32 %v1133, 1e-05
  %v1135 = vrsqrt.pop %v1134
  %v1136 = vmul.f32 %v1113, %v1135
  %v1137 = vmul.f32 %v1114, %v1135
  %v1138 = vmul.f32 %v1115, %v1135
  %v1139 = vmul.f32 %v1116, %v1135
  %1141 = vset.pattern.permute.xlu0 0
  %1142 = vperm.xlu0 %1141, %v1098
  %v1143 = vpop.permute.xlu0 %1142
  %v1145 = vmul.f32 %v1143, %v1136
  %v1146 = vmul.f32 %v1143, %v1137
  %v1147 = vmul.f32 %v1143, %v1138
  %v1148 = vmul.f32 %v1143, %v1139
  %1150 = vset.pattern.permute.xlu0 0
  %1151 = vperm.xlu0 %1150, %v1099
  %v1152 = vpop.permute.xlu0 %1151
  %v1154 = vadd.f32 %v1145, %v1152
  %v1155 = vadd.f32 %v1146, %v1152
  %v1156 = vadd.f32 %v1147, %v1152
  %v1157 = vadd.f32 %v1148, %v1152
  %v1158 = vmax.f32 %v1154, 0.0
  %v1159 = vmax.f32 %v1155, 0.0
  %v1160 = vmax.f32 %v1156, 0.0
  %v1161 = vmax.f32 %v1157, 0.0
  %v1162 = vld [vmem:[%s6] sm:$0xf]
  %v1163 = vld [vmem:[%s6 + $0x4] sm:$0xf]
  %v1164 = vld [vmem:[%s6 + $0x8] sm:$0xf]
  %1165 = vrot.lane.b32.xlu0 %v1158, 16
  %v1166 = vpop.permute.xlu0 %1165
  %1167 = vrot.lane.b32.xlu0 %v1159, 16
  %v1168 = vpop.permute.xlu0 %1167
  %v1169 = vsel %vm75, %v1166, %v1168
  %v1170 = vsel %vm75, %v1168, %v1166
  %1171 = vrot.lane.b32.xlu0 %v1160, 16
  %v1172 = vpop.permute.xlu0 %1171
  %1173 = vrot.lane.b32.xlu0 %v1161, 16
  %v1174 = vpop.permute.xlu0 %1173
  %v1175 = vsel %vm75, %v1172, %v1174
  %v1176 = vsel %vm75, %v1174, %v1172
  %v1177 = vmul.f32 %v1170, %v106
  %v1178 = vmul.f32 %v1169, %v110
  %v1179 = vmul.f32 %v1176, %v106
  %v1180 = vmul.f32 %v1175, %v110
  %1181 = vrot.lane.b32.xlu0 %v1158, 112
  %v1182 = vpop.permute.xlu0 %1181
  %1183 = vrot.lane.b32.xlu0 %v1159, 112
  %v1184 = vpop.permute.xlu0 %1183
  %v1185 = vsel %vm127, %v1182, %v1184
  %v1186 = vsel %vm127, %v1184, %v1182
  %1187 = vrot.lane.b32.xlu0 %v1160, 112
  %v1188 = vpop.permute.xlu0 %1187
  %1189 = vrot.lane.b32.xlu0 %v1161, 112
  %v1190 = vpop.permute.xlu0 %1189
  %v1191 = vsel %vm127, %v1188, %v1190
  %v1192 = vsel %vm127, %v1190, %v1188
  %v1193 = vmul.f32 %v1185, %v157
  %v1194 = vmul.f32 %v1186, %v161
  %v1195 = vmul.f32 %v1191, %v157
  %v1196 = vmul.f32 %v1192, %v161
  %1198 = vset.pattern.permute.xlu0 0
  %1199 = vperm.xlu0 %1198, %v1162
  %v1200 = vpop.permute.xlu0 %1199
  %v1202 = vmul.f32 %v1200, %v1177
  %v1203 = vmul.f32 %v1200, %v1178
  %v1204 = vmul.f32 %v1200, %v1179
  %v1205 = vmul.f32 %v1200, %v1180
  %1207 = vset.pattern.permute.xlu0 0
  %1208 = vperm.xlu0 %1207, %v1163
  %v1209 = vpop.permute.xlu0 %1208
  %v1211 = vmul.f32 %v1209, %v1158
  %v1212 = vmul.f32 %v1209, %v1159
  %v1213 = vmul.f32 %v1209, %v1160
  %v1214 = vmul.f32 %v1209, %v1161
  %v1215 = vadd.f32 %v1202, %v1211
  %v1216 = vadd.f32 %v1203, %v1212
  %v1217 = vadd.f32 %v1204, %v1213
  %v1218 = vadd.f32 %v1205, %v1214
  %1220 = vset.pattern.permute.xlu0 0
  %1221 = vperm.xlu0 %1220, %v1164
  %v1222 = vpop.permute.xlu0 %1221
  %v1224 = vmul.f32 %v1222, %v1193
  %v1225 = vmul.f32 %v1222, %v1194
  %v1226 = vmul.f32 %v1222, %v1195
  %v1227 = vmul.f32 %v1222, %v1196
  %v1228 = vadd.f32 %v1215, %v1224
  %v1229 = vadd.f32 %v1216, %v1225
  %v1230 = vadd.f32 %v1217, %v1226
  %v1231 = vadd.f32 %v1218, %v1227
  %v1232 = vld [vmem:[%s12] sm:$0xf]
  %v1233 = vld [vmem:[%s12 + $0x4] sm:$0xf]
  %v1234 = vsel %vm1100, %v1228, 0.0
  %v1235 = vsel %vm1100, %v1229, 0.0
  %v1236 = vadd.f32 %v1234, %v1235
  %1237 = vadd.xlane.f32.xlu0 %v1236
  %v1238 = vpop.xlane.xlu0 %1237
  %v1239 = vsel %vm1100, %v1230, 0.0
  %v1240 = vsel %vm1100, %v1231, 0.0
  %v1241 = vadd.f32 %v1239, %v1240
  %1242 = vadd.xlane.f32.xlu0 %v1241
  %v1243 = vpop.xlane.xlu0 %1242
  %v1244 = vadd.f32 %v1238, %v1243
  %v1245 = vmul.f32 %v1244, 0.001953125
  %v1246 = vsub.f32 %v1228, %v1245
  %v1247 = vsub.f32 %v1229, %v1245
  %v1248 = vsub.f32 %v1230, %v1245
  %v1249 = vsub.f32 %v1231, %v1245
  %v1250 = vmul.f32 %v1246, %v1246
  %v1251 = vmul.f32 %v1247, %v1247
  %v1252 = vmul.f32 %v1248, %v1248
  %v1253 = vmul.f32 %v1249, %v1249
  %v1254 = vsel %vm1100, %v1250, 0.0
  %v1255 = vsel %vm1100, %v1251, 0.0
  %v1256 = vadd.f32 %v1254, %v1255
  %1257 = vadd.xlane.f32.xlu0 %v1256
  %v1258 = vpop.xlane.xlu0 %1257
  %v1259 = vsel %vm1100, %v1252, 0.0
  %v1260 = vsel %vm1100, %v1253, 0.0
  %v1261 = vadd.f32 %v1259, %v1260
  %1262 = vadd.xlane.f32.xlu0 %v1261
  %v1263 = vpop.xlane.xlu0 %1262
  %v1264 = vadd.f32 %v1258, %v1263
  %v1265 = vmul.f32 %v1264, 0.001953125
  %v1266 = vmax.f32 %v1265, 0.0
  %v1267 = vadd.f32 %v1266, 1e-05
  %v1268 = vrsqrt.pop %v1267
  %v1269 = vmul.f32 %v1246, %v1268
  %v1270 = vmul.f32 %v1247, %v1268
  %v1271 = vmul.f32 %v1248, %v1268
  %v1272 = vmul.f32 %v1249, %v1268
  %1274 = vset.pattern.permute.xlu0 0
  %1275 = vperm.xlu0 %1274, %v1232
  %v1276 = vpop.permute.xlu0 %1275
  %v1278 = vmul.f32 %v1276, %v1269
  %v1279 = vmul.f32 %v1276, %v1270
  %v1280 = vmul.f32 %v1276, %v1271
  %v1281 = vmul.f32 %v1276, %v1272
  %1283 = vset.pattern.permute.xlu0 0
  %1284 = vperm.xlu0 %1283, %v1233
  %v1285 = vpop.permute.xlu0 %1284
  %v1287 = vadd.f32 %v1278, %v1285
  %v1288 = vadd.f32 %v1279, %v1285
  %v1289 = vadd.f32 %v1280, %v1285
  %v1290 = vadd.f32 %v1281, %v1285
  %v1291 = vld [vmem:[%s7] sm:$0xf]
  %v1292 = vld [vmem:[%s7 + $0x4] sm:$0xf]
  %v1293 = vld [vmem:[%s7 + $0x8] sm:$0xf]
  %1294 = vrot.lane.b32.xlu0 %v1287, 1
  %v1295 = vpop.permute.xlu0 %1294
  %1296 = vrot.lane.b32.xlu0 %v1288, 1
  %v1297 = vpop.permute.xlu0 %1296
  %v1298 = vsel %vm356, %v1295, %v1297
  %v1299 = vsel %vm356, %v1297, %v1295
  %1300 = vrot.lane.b32.xlu0 %v1289, 1
  %v1301 = vpop.permute.xlu0 %1300
  %1302 = vrot.lane.b32.xlu0 %v1290, 1
  %v1303 = vpop.permute.xlu0 %1302
  %v1304 = vsel %vm356, %v1301, %v1303
  %v1305 = vsel %vm356, %v1303, %v1301
  %v1306 = vmul.f32 %v1299, %v386
  %v1307 = vmul.f32 %v1298, %v390
  %v1308 = vmul.f32 %v1305, %v386
  %v1309 = vmul.f32 %v1304, %v390
  %1310 = vrot.lane.b32.xlu0 %v1287, 127
  %v1311 = vpop.permute.xlu0 %1310
  %1312 = vrot.lane.b32.xlu0 %v1288, 127
  %v1313 = vpop.permute.xlu0 %1312
  %v1314 = vsel %vm407, %v1311, %v1313
  %v1315 = vsel %vm407, %v1313, %v1311
  %1316 = vrot.lane.b32.xlu0 %v1289, 127
  %v1317 = vpop.permute.xlu0 %1316
  %1318 = vrot.lane.b32.xlu0 %v1290, 127
  %v1319 = vpop.permute.xlu0 %1318
  %v1320 = vsel %vm407, %v1317, %v1319
  %v1321 = vsel %vm407, %v1319, %v1317
  %v1322 = vmul.f32 %v1314, %v437
  %v1323 = vmul.f32 %v1315, %v441
  %v1324 = vmul.f32 %v1320, %v437
  %v1325 = vmul.f32 %v1321, %v441
  %1327 = vset.pattern.permute.xlu0 0
  %1328 = vperm.xlu0 %1327, %v1291
  %v1329 = vpop.permute.xlu0 %1328
  %v1331 = vmul.f32 %v1329, %v1306
  %v1332 = vmul.f32 %v1329, %v1307
  %v1333 = vmul.f32 %v1329, %v1308
  %v1334 = vmul.f32 %v1329, %v1309
  %1336 = vset.pattern.permute.xlu0 0
  %1337 = vperm.xlu0 %1336, %v1292
  %v1338 = vpop.permute.xlu0 %1337
  %v1340 = vmul.f32 %v1338, %v1287
  %v1341 = vmul.f32 %v1338, %v1288
  %v1342 = vmul.f32 %v1338, %v1289
  %v1343 = vmul.f32 %v1338, %v1290
  %v1344 = vadd.f32 %v1331, %v1340
  %v1345 = vadd.f32 %v1332, %v1341
  %v1346 = vadd.f32 %v1333, %v1342
  %v1347 = vadd.f32 %v1334, %v1343
  %1349 = vset.pattern.permute.xlu0 0
  %1350 = vperm.xlu0 %1349, %v1293
  %v1351 = vpop.permute.xlu0 %1350
  %v1353 = vmul.f32 %v1351, %v1322
  %v1354 = vmul.f32 %v1351, %v1323
  %v1355 = vmul.f32 %v1351, %v1324
  %v1356 = vmul.f32 %v1351, %v1325
  %v1357 = vadd.f32 %v1344, %v1353
  %v1358 = vadd.f32 %v1345, %v1354
  %v1359 = vadd.f32 %v1346, %v1355
  %v1360 = vadd.f32 %v1347, %v1356
  %v1361 = vsel %vm1100, %v1357, 0.0
  %v1362 = vsel %vm1100, %v1358, 0.0
  %v1363 = vadd.f32 %v1361, %v1362
  %1364 = vadd.xlane.f32.xlu0 %v1363
  %v1365 = vpop.xlane.xlu0 %1364
  %v1366 = vsel %vm1100, %v1359, 0.0
  %v1367 = vsel %vm1100, %v1360, 0.0
  %v1368 = vadd.f32 %v1366, %v1367
  %1369 = vadd.xlane.f32.xlu0 %v1368
  %v1370 = vpop.xlane.xlu0 %1369
  %v1371 = vmul.f32 %v1365, 0.00390625
  %v1372 = vmul.f32 %v1370, 0.00390625
  %v1373 = vld [vmem:[%s2] sm:$0xf]
  %v1374 = vld [vmem:[%s2 + $0x4] sm:$0xf]
  %v1375 = vld [vmem:[%s2 + $0x8] sm:$0xf]
  %v1376 = vld [vmem:[%s2 + $0xc] sm:$0xf]
  %v1377 = vlaneseq
  %v1378 = vshrl.u32 %v1377, 7
  %v1379 = vsub.s32 0, %v1378
  %v1380 = vrot.slane %v1371, %v1379
  %v1381 = vlaneseq
  %v1382 = vshrl.u32 %v1381, 7
  %v1383 = vsub.s32 0, %v1382
  %v1384 = vrot.slane %v1372, %v1383
  %v1385 = vmul.f32 %v1373, %v1380
  %v1386 = vmul.f32 %v1373, %v1384
  %v1387 = vlaneseq
  %v1388 = vshrl.u32 %v1387, 7
  %v1389 = vsub.s32 1, %v1388
  %v1390 = vrot.slane %v1371, %v1389
  %v1391 = vlaneseq
  %v1392 = vshrl.u32 %v1391, 7
  %v1393 = vsub.s32 1, %v1392
  %v1394 = vrot.slane %v1372, %v1393
  %v1395 = vmul.f32 %v1374, %v1390
  %v1396 = vmul.f32 %v1374, %v1394
  %v1397 = vadd.f32 %v1385, %v1395
  %v1398 = vadd.f32 %v1386, %v1396
  %v1399 = vlaneseq
  %v1400 = vshrl.u32 %v1399, 7
  %v1401 = vsub.s32 2, %v1400
  %v1402 = vrot.slane %v1371, %v1401
  %v1403 = vlaneseq
  %v1404 = vshrl.u32 %v1403, 7
  %v1405 = vsub.s32 2, %v1404
  %v1406 = vrot.slane %v1372, %v1405
  %v1407 = vmul.f32 %v1375, %v1402
  %v1408 = vmul.f32 %v1375, %v1406
  %v1409 = vadd.f32 %v1397, %v1407
  %v1410 = vadd.f32 %v1398, %v1408
  %v1411 = vlaneseq
  %v1412 = vshrl.u32 %v1411, 7
  %v1413 = vsub.s32 3, %v1412
  %v1414 = vrot.slane %v1371, %v1413
  %v1415 = vlaneseq
  %v1416 = vshrl.u32 %v1415, 7
  %v1417 = vsub.s32 3, %v1416
  %v1418 = vrot.slane %v1372, %v1417
  %v1419 = vmul.f32 %v1376, %v1414
  %v1420 = vmul.f32 %v1376, %v1418
  %v1421 = vadd.f32 %v1409, %v1419
  %v1422 = vadd.f32 %v1410, %v1420
  %v1423 = vsub.f32 0.0, %v1421
  %v1424 = vsub.f32 0.0, %v1422
  %v1425 = vmul.f32 %v1423, 1.442695
  %v1426 = vpow.pop %v1425
  %v1427 = vmul.f32 %v1424, 1.442695
  %v1428 = vpow.pop %v1427
  %v1429 = vadd.f32 %v1426, 1.0
  %v1430 = vadd.f32 %v1428, 1.0
  %v1431 = vrcp.pop %v1429
  %v1432 = vmul.f32 1.0, %v1431
  %v1433 = vrcp.pop %v1430
  %v1434 = vmul.f32 1.0, %v1433
  %1436 = vset.pattern.permute.xlu0 0
  %1437 = vperm.xlu0 %1436, %v1432
  %v1438 = vpop.permute.xlu0 %1437
  %1441 = vset.pattern.permute.xlu0 0
  %1442 = vperm.xlu0 %1441, %v1434
  %v1443 = vpop.permute.xlu0 %1442
  %v1445 = vmul.f32 %v1357, %v1438
  %v1446 = vmul.f32 %v1358, %v1438
  %v1447 = vmul.f32 %v1359, %v1443
  %v1448 = vmul.f32 %v1360, %v1443
  %v1449 = vld [vmem:[%s13] sm:$0xf]
  %v1450 = vld [vmem:[%s13 + $0x4] sm:$0xf]
  %v1451 = vsel %vm1100, %v1445, 0.0
  %v1452 = vsel %vm1100, %v1446, 0.0
  %v1453 = vadd.f32 %v1451, %v1452
  %1454 = vadd.xlane.f32.xlu0 %v1453
  %v1455 = vpop.xlane.xlu0 %1454
  %v1456 = vsel %vm1100, %v1447, 0.0
  %v1457 = vsel %vm1100, %v1448, 0.0
  %v1458 = vadd.f32 %v1456, %v1457
  %1459 = vadd.xlane.f32.xlu0 %v1458
  %v1460 = vpop.xlane.xlu0 %1459
  %v1461 = vadd.f32 %v1455, %v1460
  %v1462 = vmul.f32 %v1461, 0.001953125
  %v1463 = vsub.f32 %v1445, %v1462
  %v1464 = vsub.f32 %v1446, %v1462
  %v1465 = vsub.f32 %v1447, %v1462
  %v1466 = vsub.f32 %v1448, %v1462
  %v1467 = vmul.f32 %v1463, %v1463
  %v1468 = vmul.f32 %v1464, %v1464
  %v1469 = vmul.f32 %v1465, %v1465
  %v1470 = vmul.f32 %v1466, %v1466
  %v1471 = vsel %vm1100, %v1467, 0.0
  %v1472 = vsel %vm1100, %v1468, 0.0
  %v1473 = vadd.f32 %v1471, %v1472
  %1474 = vadd.xlane.f32.xlu0 %v1473
  %v1475 = vpop.xlane.xlu0 %1474
  %v1476 = vsel %vm1100, %v1469, 0.0
  %v1477 = vsel %vm1100, %v1470, 0.0
  %v1478 = vadd.f32 %v1476, %v1477
  %1479 = vadd.xlane.f32.xlu0 %v1478
  %v1480 = vpop.xlane.xlu0 %1479
  %v1481 = vadd.f32 %v1475, %v1480
  %v1482 = vmul.f32 %v1481, 0.001953125
  %v1483 = vmax.f32 %v1482, 0.0
  %v1484 = vadd.f32 %v1483, 1e-05
  %v1485 = vrsqrt.pop %v1484
  %v1486 = vmul.f32 %v1463, %v1485
  %v1487 = vmul.f32 %v1464, %v1485
  %v1488 = vmul.f32 %v1465, %v1485
  %v1489 = vmul.f32 %v1466, %v1485
  %1491 = vset.pattern.permute.xlu0 0
  %1492 = vperm.xlu0 %1491, %v1449
  %v1493 = vpop.permute.xlu0 %1492
  %v1495 = vmul.f32 %v1493, %v1486
  %v1496 = vmul.f32 %v1493, %v1487
  %v1497 = vmul.f32 %v1493, %v1488
  %v1498 = vmul.f32 %v1493, %v1489
  %1500 = vset.pattern.permute.xlu0 0
  %1501 = vperm.xlu0 %1500, %v1450
  %v1502 = vpop.permute.xlu0 %1501
  %v1504 = vadd.f32 %v1495, %v1502
  %v1505 = vadd.f32 %v1496, %v1502
  %v1506 = vadd.f32 %v1497, %v1502
  %v1507 = vadd.f32 %v1498, %v1502
  %v1508 = vld [vmem:[%s8] sm:$0xff]
  %v1509 = vld [vmem:[%s8 + $0x8] sm:$0xff]
  %v1510 = vld [vmem:[%s8 + $0x10] sm:$0xff]
  %v1511 = vld [vmem:[%s8 + $0x18] sm:$0xff]
  %v1512 = vld [vmem:[%s8 + $0x20] sm:$0xff]
  %v1513 = vld [vmem:[%s8 + $0x28] sm:$0xff]
  %v1514 = vld [vmem:[%s8 + $0x30] sm:$0xff]
  %v1515 = vld [vmem:[%s8 + $0x38] sm:$0xff]
  %1517 = vset.pattern.permute.xlu0 0
  %1518 = vperm.xlu0 %1517, %v1508
  %v1519 = vpop.permute.xlu0 %1518
  %1522 = vset.pattern.permute.xlu0 0
  %1523 = vperm.xlu0 %1522, %v1509
  %v1524 = vpop.permute.xlu0 %1523
  %v1526 = vlaneseq
  %v1527 = vshrl.u32 %v1526, 7
  %v1528 = vsub.s32 0, %v1527
  %v1529 = vrot.slane %v1504, %v1528
  %v1530 = vlaneseq
  %v1531 = vshrl.u32 %v1530, 7
  %v1532 = vsub.s32 0, %v1531
  %v1533 = vrot.slane %v1505, %v1532
  %v1534 = vlaneseq
  %v1535 = vshrl.u32 %v1534, 7
  %v1536 = vsub.s32 0, %v1535
  %v1537 = vrot.slane %v1506, %v1536
  %v1538 = vlaneseq
  %v1539 = vshrl.u32 %v1538, 7
  %v1540 = vsub.s32 0, %v1539
  %v1541 = vrot.slane %v1507, %v1540
  %v1542 = vmul.f32 %v1519, %v1529
  %v1543 = vmul.f32 %v1519, %v1533
  %v1544 = vmul.f32 %v1524, %v1529
  %v1545 = vmul.f32 %v1524, %v1533
  %v1546 = vmul.f32 %v1519, %v1537
  %v1547 = vmul.f32 %v1519, %v1541
  %v1548 = vmul.f32 %v1524, %v1537
  %v1549 = vmul.f32 %v1524, %v1541
  %1551 = vset.pattern.permute.xlu0 0
  %1552 = vperm.xlu0 %1551, %v1510
  %v1553 = vpop.permute.xlu0 %1552
  %1556 = vset.pattern.permute.xlu0 0
  %1557 = vperm.xlu0 %1556, %v1511
  %v1558 = vpop.permute.xlu0 %1557
  %v1560 = vlaneseq
  %v1561 = vshrl.u32 %v1560, 7
  %v1562 = vsub.s32 1, %v1561
  %v1563 = vrot.slane %v1504, %v1562
  %v1564 = vlaneseq
  %v1565 = vshrl.u32 %v1564, 7
  %v1566 = vsub.s32 1, %v1565
  %v1567 = vrot.slane %v1505, %v1566
  %v1568 = vlaneseq
  %v1569 = vshrl.u32 %v1568, 7
  %v1570 = vsub.s32 1, %v1569
  %v1571 = vrot.slane %v1506, %v1570
  %v1572 = vlaneseq
  %v1573 = vshrl.u32 %v1572, 7
  %v1574 = vsub.s32 1, %v1573
  %v1575 = vrot.slane %v1507, %v1574
  %v1576 = vmul.f32 %v1553, %v1563
  %v1577 = vmul.f32 %v1553, %v1567
  %v1578 = vmul.f32 %v1558, %v1563
  %v1579 = vmul.f32 %v1558, %v1567
  %v1580 = vmul.f32 %v1553, %v1571
  %v1581 = vmul.f32 %v1553, %v1575
  %v1582 = vmul.f32 %v1558, %v1571
  %v1583 = vmul.f32 %v1558, %v1575
  %v1584 = vadd.f32 %v1542, %v1576
  %v1585 = vadd.f32 %v1543, %v1577
  %v1586 = vadd.f32 %v1544, %v1578
  %v1587 = vadd.f32 %v1545, %v1579
  %v1588 = vadd.f32 %v1546, %v1580
  %v1589 = vadd.f32 %v1547, %v1581
  %v1590 = vadd.f32 %v1548, %v1582
  %v1591 = vadd.f32 %v1549, %v1583
  %1593 = vset.pattern.permute.xlu0 0
  %1594 = vperm.xlu0 %1593, %v1512
  %v1595 = vpop.permute.xlu0 %1594
  %1598 = vset.pattern.permute.xlu0 0
  %1599 = vperm.xlu0 %1598, %v1513
  %v1600 = vpop.permute.xlu0 %1599
  %v1602 = vlaneseq
  %v1603 = vshrl.u32 %v1602, 7
  %v1604 = vsub.s32 2, %v1603
  %v1605 = vrot.slane %v1504, %v1604
  %v1606 = vlaneseq
  %v1607 = vshrl.u32 %v1606, 7
  %v1608 = vsub.s32 2, %v1607
  %v1609 = vrot.slane %v1505, %v1608
  %v1610 = vlaneseq
  %v1611 = vshrl.u32 %v1610, 7
  %v1612 = vsub.s32 2, %v1611
  %v1613 = vrot.slane %v1506, %v1612
  %v1614 = vlaneseq
  %v1615 = vshrl.u32 %v1614, 7
  %v1616 = vsub.s32 2, %v1615
  %v1617 = vrot.slane %v1507, %v1616
  %v1618 = vmul.f32 %v1595, %v1605
  %v1619 = vmul.f32 %v1595, %v1609
  %v1620 = vmul.f32 %v1600, %v1605
  %v1621 = vmul.f32 %v1600, %v1609
  %v1622 = vmul.f32 %v1595, %v1613
  %v1623 = vmul.f32 %v1595, %v1617
  %v1624 = vmul.f32 %v1600, %v1613
  %v1625 = vmul.f32 %v1600, %v1617
  %v1626 = vadd.f32 %v1584, %v1618
  %v1627 = vadd.f32 %v1585, %v1619
  %v1628 = vadd.f32 %v1586, %v1620
  %v1629 = vadd.f32 %v1587, %v1621
  %v1630 = vadd.f32 %v1588, %v1622
  %v1631 = vadd.f32 %v1589, %v1623
  %v1632 = vadd.f32 %v1590, %v1624
  %v1633 = vadd.f32 %v1591, %v1625
  %1635 = vset.pattern.permute.xlu0 0
  %1636 = vperm.xlu0 %1635, %v1514
  %v1637 = vpop.permute.xlu0 %1636
  %1640 = vset.pattern.permute.xlu0 0
  %1641 = vperm.xlu0 %1640, %v1515
  %v1642 = vpop.permute.xlu0 %1641
  %v1644 = vlaneseq
  %v1645 = vshrl.u32 %v1644, 7
  %v1646 = vsub.s32 3, %v1645
  %v1647 = vrot.slane %v1504, %v1646
  %v1648 = vlaneseq
  %v1649 = vshrl.u32 %v1648, 7
  %v1650 = vsub.s32 3, %v1649
  %v1651 = vrot.slane %v1505, %v1650
  %v1652 = vlaneseq
  %v1653 = vshrl.u32 %v1652, 7
  %v1654 = vsub.s32 3, %v1653
  %v1655 = vrot.slane %v1506, %v1654
  %v1656 = vlaneseq
  %v1657 = vshrl.u32 %v1656, 7
  %v1658 = vsub.s32 3, %v1657
  %v1659 = vrot.slane %v1507, %v1658
  %v1660 = vmul.f32 %v1637, %v1647
  %v1661 = vmul.f32 %v1637, %v1651
  %v1662 = vmul.f32 %v1642, %v1647
  %v1663 = vmul.f32 %v1642, %v1651
  %v1664 = vmul.f32 %v1637, %v1655
  %v1665 = vmul.f32 %v1637, %v1659
  %v1666 = vmul.f32 %v1642, %v1655
  %v1667 = vmul.f32 %v1642, %v1659
  %v1668 = vadd.f32 %v1626, %v1660
  %v1669 = vadd.f32 %v1627, %v1661
  %v1670 = vadd.f32 %v1628, %v1662
  %v1671 = vadd.f32 %v1629, %v1663
  %v1672 = vadd.f32 %v1630, %v1664
  %v1673 = vadd.f32 %v1631, %v1665
  %v1674 = vadd.f32 %v1632, %v1666
  %v1675 = vadd.f32 %v1633, %v1667
  %v1676 = vld [vmem:[%s14] sm:$0xff]
  %v1677 = vld [vmem:[%s14 + $0x8] sm:$0xff]
  %v1678 = vld [vmem:[%s14 + $0x10] sm:$0xff]
  %v1679 = vld [vmem:[%s14 + $0x18] sm:$0xff]
  %v1680 = vadd.f32 %v1668, %v1669
  %1681 = vadd.xlane.f32.xlu0 %v1680
  %v1682 = vpop.xlane.xlu0 %1681
  %v1683 = vadd.f32 %v1670, %v1671
  %1684 = vadd.xlane.f32.xlu0 %v1683
  %v1685 = vpop.xlane.xlu0 %1684
  %v1686 = vadd.f32 %v1672, %v1673
  %1687 = vadd.xlane.f32.xlu0 %v1686
  %v1688 = vpop.xlane.xlu0 %1687
  %v1689 = vadd.f32 %v1674, %v1675
  %1690 = vadd.xlane.f32.xlu0 %v1689
  %v1691 = vpop.xlane.xlu0 %1690
  %v1692 = vadd.f32 %v1682, %v1688
  %v1693 = vadd.f32 %v1685, %v1691
  %v1694 = vmul.f32 %v1692, 0.001953125
  %v1695 = vmul.f32 %v1693, 0.001953125
  %v1696 = vsub.f32 %v1668, %v1694
  %v1697 = vsub.f32 %v1669, %v1694
  %v1698 = vsub.f32 %v1670, %v1695
  %v1699 = vsub.f32 %v1671, %v1695
  %v1700 = vsub.f32 %v1672, %v1694
  %v1701 = vsub.f32 %v1673, %v1694
  %v1702 = vsub.f32 %v1674, %v1695
  %v1703 = vsub.f32 %v1675, %v1695
  %v1704 = vmul.f32 %v1696, %v1696
  %v1705 = vmul.f32 %v1697, %v1697
  %v1706 = vmul.f32 %v1698, %v1698
  %v1707 = vmul.f32 %v1699, %v1699
  %v1708 = vmul.f32 %v1700, %v1700
  %v1709 = vmul.f32 %v1701, %v1701
  %v1710 = vmul.f32 %v1702, %v1702
  %v1711 = vmul.f32 %v1703, %v1703
  %v1712 = vadd.f32 %v1704, %v1705
  %1713 = vadd.xlane.f32.xlu0 %v1712
  %v1714 = vpop.xlane.xlu0 %1713
  %v1715 = vadd.f32 %v1706, %v1707
  %1716 = vadd.xlane.f32.xlu0 %v1715
  %v1717 = vpop.xlane.xlu0 %1716
  %v1718 = vadd.f32 %v1708, %v1709
  %1719 = vadd.xlane.f32.xlu0 %v1718
  %v1720 = vpop.xlane.xlu0 %1719
  %v1721 = vadd.f32 %v1710, %v1711
  %1722 = vadd.xlane.f32.xlu0 %v1721
  %v1723 = vpop.xlane.xlu0 %1722
  %v1724 = vadd.f32 %v1714, %v1720
  %v1725 = vadd.f32 %v1717, %v1723
  %v1726 = vmul.f32 %v1724, 0.001953125
  %v1727 = vmul.f32 %v1725, 0.001953125
  %v1728 = vmax.f32 %v1726, 0.0
  %v1729 = vmax.f32 %v1727, 0.0
  %v1730 = vadd.f32 %v1728, 1e-05
  %v1731 = vadd.f32 %v1729, 1e-05
  %v1732 = vrsqrt.pop %v1730
  %v1733 = vrsqrt.pop %v1731
  %v1734 = vmul.f32 %v1696, %v1732
  %v1735 = vmul.f32 %v1697, %v1732
  %v1736 = vmul.f32 %v1698, %v1733
  %v1737 = vmul.f32 %v1699, %v1733
  %v1738 = vmul.f32 %v1700, %v1732
  %v1739 = vmul.f32 %v1701, %v1732
  %v1740 = vmul.f32 %v1702, %v1733
  %v1741 = vmul.f32 %v1703, %v1733
  %1743 = vset.pattern.permute.xlu0 0
  %1744 = vperm.xlu0 %1743, %v1676
  %v1745 = vpop.permute.xlu0 %1744
  %1748 = vset.pattern.permute.xlu0 0
  %1749 = vperm.xlu0 %1748, %v1677
  %v1750 = vpop.permute.xlu0 %1749
  %v1752 = vmul.f32 %v1745, %v1734
  %v1753 = vmul.f32 %v1745, %v1735
  %v1754 = vmul.f32 %v1750, %v1736
  %v1755 = vmul.f32 %v1750, %v1737
  %v1756 = vmul.f32 %v1745, %v1738
  %v1757 = vmul.f32 %v1745, %v1739
  %v1758 = vmul.f32 %v1750, %v1740
  %v1759 = vmul.f32 %v1750, %v1741
  %1761 = vset.pattern.permute.xlu0 0
  %1762 = vperm.xlu0 %1761, %v1678
  %v1763 = vpop.permute.xlu0 %1762
  %1766 = vset.pattern.permute.xlu0 0
  %1767 = vperm.xlu0 %1766, %v1679
  %v1768 = vpop.permute.xlu0 %1767
  %v1770 = vadd.f32 %v1752, %v1763
  %v1771 = vadd.f32 %v1753, %v1763
  %v1772 = vadd.f32 %v1754, %v1768
  %v1773 = vadd.f32 %v1755, %v1768
  %v1774 = vadd.f32 %v1756, %v1763
  %v1775 = vadd.f32 %v1757, %v1763
  %v1776 = vadd.f32 %v1758, %v1768
  %v1777 = vadd.f32 %v1759, %v1768
  %v1778 = vadd.f32 %v1770, %v614
  %v1779 = vadd.f32 %v1771, %v615
  %v1780 = vadd.f32 %v1772, %v616
  %v1781 = vadd.f32 %v1773, %v617
  %v1782 = vadd.f32 %v1774, %v618
  %v1783 = vadd.f32 %v1775, %v619
  %v1784 = vadd.f32 %v1776, %v620
  %v1785 = vadd.f32 %v1777, %v621
  %v1786 = vmax.f32 %v1778, 0.0
  %v1787 = vmax.f32 %v1779, 0.0
  %v1788 = vmax.f32 %v1780, 0.0
  %v1789 = vmax.f32 %v1781, 0.0
  %v1790 = vmax.f32 %v1782, 0.0
  %v1791 = vmax.f32 %v1783, 0.0
  %v1792 = vmax.f32 %v1784, 0.0
  %v1793 = vmax.f32 %v1785, 0.0
  %1794 = vst [vmem:[%s15] sm:$0xff] %v1786
  %1795 = vst [vmem:[%s15 + $0x8] sm:$0xff] %v1787
  %1796 = vst [vmem:[%s15 + $0x10] sm:$0xff] %v1788
  %1797 = vst [vmem:[%s15 + $0x18] sm:$0xff] %v1789
  %1798 = vst [vmem:[%s15 + $0x20] sm:$0xff] %v1790
  %1799 = vst [vmem:[%s15 + $0x28] sm:$0xff] %v1791
  %1800 = vst [vmem:[%s15 + $0x30] sm:$0xff] %v1792
  %1801 = vst [vmem:[%s15 + $0x38] sm:$0xff] %v1793
  // Predicated region
  $region62: #{lfem_forward.1} parent=0 // pred_check
    _
  $region63: #{lfem_forward.1} parent=0 // pred_check_branch
    %1803 = sbr.rel (0) target = $region65
  $region64: #{lfem_forward.1} parent=0 // pred_region
    _
  $region65: #{lfem_forward.1} parent=0 // pred_fallthru
    _
  // Predicated region
  $region66: #{lfem_forward.1} parent=0 // pred_check
    _
  $region67: #{lfem_forward.1} parent=0 // pred_check_branch
    %1805 = sbr.rel (0) target = $region69
  $region68: #{lfem_forward.1} parent=0 // pred_region
    _
  $region69: #{lfem_forward.1} parent=0 // pred_fallthru
    _

</llo_original>
